<compile_context>
chip_gen: v6e
topology: v6e:2x2x1
jax: 0.10.0
libtpu: 0.0.40
codegen_flags: <defaults>
</compile_context>

<pallas_src>
import functools

import jax
import jax.numpy as jnp
from jax.experimental import pallas as pl
from jax.experimental.pallas import tpu as pltpu


_F32_MAX = float(jnp.finfo(jnp.float32).max)


def _round_up(v, m):
    return (v + m - 1) // m * m


# ---------------------------- Pallas kernels ------------------------------ #

def _proj_kernel(p_ref, w_ref, o_ref, *, s_valid, tile_n, n_tiles):
    """One (R, tile_n) tile of projections = w (R, K) @ patches (K, tile_n).

    Inputs are bf16, accumulation / output are f32.  Columns past the real
    spatial extent of this image exist only in the last tile; they are filled
    with the largest finite f32 so that, after sorting, they occupy identical
    trailing positions for x and y and contribute exactly 0 to |sort(x)-sort(y)|.
    """
    proj = jnp.dot(w_ref[...], p_ref[0], preferred_element_type=jnp.float32)
    if s_valid % tile_n == 0:
        o_ref[...] = proj                     # no padded columns at all
    else:
        j = pl.program_id(1)
        last = j == n_tiles - 1

        @pl.when(jnp.logical_not(last))
        def _():
            o_ref[...] = proj                 # common path: mask-free store

        @pl.when(last)
        def _():
            col = j * tile_n + jax.lax.broadcasted_iota(jnp.int32, proj.shape, 1)
            o_ref[...] = jnp.where(col < s_valid, proj, _F32_MAX)


def _l1_kernel(a_ref, b_ref, o_ref, *, tile_r, tile_n, r_valid, n_valid,
               n_col_tiles):
    """Per-tile partial row sums of |a - b| (masked only where padding exists)."""
    d = jnp.abs(a_ref[...] - b_ref[...])

    if r_valid % tile_r != 0:                 # only when R doesn't tile evenly
        r = pl.program_id(0)
        row = r * tile_r + jax.lax.broadcasted_iota(jnp.int32, d.shape, 0)
        d = jnp.where(row < r_valid, d, 0.0)

    def _store(vals):
        o_ref[...] = jnp.sum(vals, axis=1, keepdims=True)[None, None]

    if n_valid % tile_n != 0:                 # column padding only in last tile
        j = pl.program_id(1)
        last = j == n_col_tiles - 1

        @pl.when(jnp.logical_not(last))
        def _():
            _store(d)

        @pl.when(last)
        def _():
            col = j * tile_n + jax.lax.broadcasted_iota(jnp.int32, d.shape, 1)
            _store(jnp.where(col < n_valid, d, 0.0))
    else:
        _store(d)


# ------------------------------ wrappers ----------------------------------- #

def _extract_patch_cols(x, k, s):
    """NCHW image -> (B, C*k*k, H'*W') patch columns (K-major layout).

    XLA's native im2col.  The K-major layout lets the projection kernel consume
    it with zero transposes of the big patch / projection tables; running it on
    bf16 input keeps the materialized patch table at half width in HBM.
    """
    # TODO(synk): fully fusing im2col into the projection kernel (implicit-GEMM
    # from image tiles held in VMEM) would remove the k^2-inflated patch table
    # from HBM entirely; kept XLA's conv_general_dilated_patches (now bf16).
    p = jax.lax.conv_general_dilated_patches(
        x, filter_shape=(k, k), window_strides=(s, s), padding='VALID')
    b, kk, ho, wo = p.shape
    return p.reshape(b, kk, ho * wo)


def _project(patches, w_mat):
    """patches (B, K, S) bf16, w_mat (R, K) bf16 -> (R, B*S_pad) f32 projections."""
    B, K, S = patches.shape
    R = w_mat.shape[0]
    # Balanced lane tile along the spatial axis: big enough to amortize the
    # ~0.35 us per-grid-step overhead, small enough that pipelined buffers stay
    # ~10 MiB (fits every generation, incl. v7x's 64 MiB VMEM), and chosen to
    # cap per-image padding at <128 columns (padding feeds the XLA sort + L1).
    cap = 4096
    n_chunks = -(-S // cap)
    tile_n = int(min(cap, _round_up(-(-S // n_chunks), 128)))
    n_tiles = pl.cdiv(S, tile_n)
    s_pad = n_tiles * tile_n

    kernel = functools.partial(_proj_kernel, s_valid=S, tile_n=tile_n,
                               n_tiles=n_tiles)
    out = pl.pallas_call(
        kernel,
        out_shape=jax.ShapeDtypeStruct((R, B * s_pad), jnp.float32),
        grid_spec=pltpu.PrefetchScalarGridSpec(
            num_scalar_prefetch=0,
            grid=(B, n_tiles),
            in_specs=[
                pl.BlockSpec((1, K, tile_n), lambda b, j: (b, 0, j)),
                pl.BlockSpec((R, K), lambda b, j: (0, 0)),
            ],
            out_specs=pl.BlockSpec(
                (R, tile_n), lambda b, j, nt=n_tiles: (0, b * nt + j)),
        ),
        compiler_params=pltpu.CompilerParams(
            dimension_semantics=("parallel", "parallel"),
            vmem_limit_bytes=32 * 1024 * 1024),
    )(patches, w_mat)
    return out


def _sorted_l1_sum(a, b):
    """Tiled Pallas reduction: sum(|a - b|) over two equal-shape (R, N) f32 tables."""
    R, N = a.shape
    tile_r = int(min(128, _round_up(R, 8)))
    tile_n = int(min(8192, _round_up(N, 128)))
    n_r = pl.cdiv(R, tile_r)
    n_n = pl.cdiv(N, tile_n)

    kernel = functools.partial(_l1_kernel, tile_r=tile_r, tile_n=tile_n,
                               r_valid=R, n_valid=N, n_col_tiles=n_n)
    parts = pl.pallas_call(
        kernel,
        out_shape=jax.ShapeDtypeStruct((n_r, n_n, tile_r, 1), jnp.float32),
        grid_spec=pltpu.PrefetchScalarGridSpec(
            num_scalar_prefetch=0,
            grid=(n_r, n_n),
            in_specs=[
                pl.BlockSpec((tile_r, tile_n), lambda r, j: (r, j)),
                pl.BlockSpec((tile_r, tile_n), lambda r, j: (r, j)),
            ],
            out_specs=pl.BlockSpec(
                (1, 1, tile_r, 1), lambda r, j: (r, j, 0, 0)),
        ),
        compiler_params=pltpu.CompilerParams(
            dimension_semantics=("parallel", "parallel"),
            vmem_limit_bytes=32 * 1024 * 1024),
    )(a, b)
    return jnp.sum(parts)


@functools.partial(jax.jit, static_argnames=("patch_size", "stride"))
def _patch_swd_forward(x, y, w_mat, *, patch_size, stride):
    # bf16 matmul inputs (halves patch-table HBM traffic + native MXU path);
    # accumulation, sort, and L1 stay f32.
    xb = x.astype(jnp.bfloat16)
    yb = y.astype(jnp.bfloat16)
    px = _extract_patch_cols(xb, patch_size, stride)   # (B, K, S) bf16
    py = _extract_patch_cols(yb, patch_size, stride)
    B, _, S = px.shape
    R = w_mat.shape[0]
    wb = w_mat.astype(jnp.bfloat16)

    projx = _project(px, wb)                           # (R, B*S_pad) f32
    projy = _project(py, wb)

    # TODO(synk): torch.sort has no clean Pallas TPU equivalent; the sort of
    # the projection tables stays in XLA between the two Pallas kernels.
    sx = jnp.sort(projx, axis=1)
    sy = jnp.sort(projy, axis=1)

    total = _sorted_l1_sum(sx, sy)
    return total / (R * B * S)          # padded columns contribute exactly 0


class PatchSWDLoss:
    """JAX/Pallas forward of the PyTorch PatchSWDLoss module.

    Random projection directions are drawn once in __init__ from a PRNG key
    (randn normalized to unit per-projection std, as in compute_swd); the torch
    reference redraws them on every call, so only the distributional semantics
    (a Monte-Carlo sliced-Wasserstein estimate) can be matched.
    """

    def __init__(self, patch_size=7, stride=1, n_samples=None, num_proj=256,
                 sample_same_locations=True, batch_reduction='mean',
                 normalize_patch='none', n_channels=4, key=None):
        # TODO(synk): n_samples / sample_same_locations patch subsampling is
        # not implemented (defaults => use every patch, matching n_samples=None).
        if key is None:
            key = jax.random.PRNGKey(0)
        self.patch_size = patch_size
        self.stride = stride
        self.num_proj = num_proj
        self.batch_reduction = batch_reduction   # patches pooled over batch, mean
        k2 = n_channels * patch_size * patch_size

        w = jax.random.normal(key, (num_proj, k2), dtype=jnp.float32)
        w = w / (jnp.std(w, axis=1, keepdims=True, ddof=1) + 1e-12)
        # Patch normalization folded into the projection weights (centering the
        # patches is algebraically identical to centering the weights).
        if normalize_patch == 'channel_mean':
            w4 = w.reshape(num_proj, n_channels, patch_size, patch_size)
            w4 = w4 - jnp.mean(w4, axis=(2, 3), keepdims=True)
            w = w4.reshape(num_proj, k2)
        elif normalize_patch == 'mean':
            w = w - jnp.mean(w, axis=1, keepdims=True)
        self.w_mat = w                                        # (num_proj, C*k*k)
        self.name = f'PatchSWD(p-{patch_size}:{stride})'

    def __call__(self, x, y):
        return _patch_swd_forward(x, y, self.w_mat,
                                  patch_size=self.patch_size,
                                  stride=self.stride)


def _reference_loss(x, y, w_mat, k, s):
    """Pure-JAX f32 reference (no Pallas) for a small-shape sanity check."""
    px = _extract_patch_cols(x.astype(jnp.float32), k, s)
    py = _extract_patch_cols(y.astype(jnp.float32), k, s)
    B, K, S = px.shape
    pxf = px.transpose(0, 2, 1).reshape(B * S, K)
    pyf = py.transpose(0, 2, 1).reshape(B * S, K)
    projx = jnp.matmul(pxf, w_mat.T, precision=jax.lax.Precision.HIGHEST)
    projy = jnp.matmul(pyf, w_mat.T, precision=jax.lax.Precision.HIGHEST)
    sx = jnp.sort(projx, axis=0)
    sy = jnp.sort(projy, axis=0)
    return jnp.mean(jnp.abs(sx - sy))


if __name__ == "__main__":
    key = jax.random.PRNGKey(0)
    kx, ky, kp = jax.random.split(key, 3)
    B, C, H, W = 2, 4, 16, 16
    x = jax.random.normal(kx, (B, C, H, W), dtype=jnp.float32)
    y = jax.random.normal(ky, (B, C, H, W), dtype=jnp.float32)

    loss_mod = PatchSWDLoss(patch_size=7, stride=1, num_proj=256,
                            n_channels=C, key=kp)
    loss = loss_mod(x, y)
    jax.block_until_ready(loss)
    assert loss.shape == () and bool(jnp.isfinite(loss))

    ref = _reference_loss(x, y, loss_mod.w_mat, 7, 1)
    assert abs(float(loss) - float(ref)) <= 0.05 * max(1.0, abs(float(ref))), (
        float(loss), float(ref))
    print("KERNEL_OK")
</pallas_src>

<mosaic_0001>
module attributes {stable_mosaic.version = 11 : i64} {
  func.func @_proj_kernel(%arg0: i32, %arg1: i32, %arg2: memref<1x196x128xbf16, #tpu.memory_space<vmem>>, %arg3: memref<256x196xbf16, #tpu.memory_space<vmem>>, %arg4: memref<256x128xf32, #tpu.memory_space<vmem>>) attributes {dimension_semantics = [#tpu.dimension_semantics<parallel>, #tpu.dimension_semantics<parallel>], iteration_bounds = array<i64: 2, 1>, scalar_prefetch = 0 : i64, scratch_operands = 0 : i64, tpu.core_type = #tpu.core_type<tc>, window_params = [{transform_indices = @transform_0, window_bounds = array<i64: 1, 196, 128>}, {pipeline_mode = #tpu.pipeline_mode<synchronous>, transform_indices = @transform_1, window_bounds = array<i64: 256, 196>}, {transform_indices = @transform_2, window_bounds = array<i64: 256, 128>}]} {
    %c0 = arith.constant 0 : index
    %c0_0 = arith.constant 0 : index
    %0 = vector.load %arg3[%c0, %c0_0] : memref<256x196xbf16, #tpu.memory_space<vmem>>, vector<256x196xbf16>
    %c0_1 = arith.constant 0 : index
    %c0_2 = arith.constant 0 : index
    %c0_3 = arith.constant 0 : index
    %1 = vector.load %arg2[%c0_1, %c0_2, %c0_3] : memref<1x196x128xbf16, #tpu.memory_space<vmem>>, vector<1x196x128xbf16>
    %2 = vector.shape_cast %1 : vector<1x196x128xbf16> to vector<196x128xbf16>
    %cst = arith.constant dense<0.000000e+00> : vector<256x128xf32>
    %3 = tpu.matmul %0, %2, %cst {dimension_numbers = #tpu.dot_dimension_numbers<[1], [0], [0], [1], [0, 0, 1, 1], [], []>} : vector<256x196xbf16>, vector<196x128xbf16>, vector<256x128xf32> -> vector<256x128xf32>
    %c0_i32 = arith.constant 0 : i32
    %4 = arith.cmpi eq, %arg1, %c0_i32 : i32
    %true = arith.constant true
    %5 = arith.xori %4, %true : i1
    %6 = arith.extui %5 : i1 to i32
    %c0_i32_4 = arith.constant 0 : i32
    %7 = arith.cmpi ne, %6, %c0_i32_4 : i32
    scf.if %7 {
      %c0_6 = arith.constant 0 : index
      %c0_7 = arith.constant 0 : index
      %10 = vector.load %arg4[%c0_6, %c0_7] : memref<256x128xf32, #tpu.memory_space<vmem>>, vector<256x128xf32>
      tpu.vector_store %arg4[%c0_6, %c0_7], %3 {strides = array<i32>} : memref<256x128xf32, #tpu.memory_space<vmem>>, vector<256x128xf32>,
    } else {
    }
    %8 = arith.extui %4 : i1 to i32
    %c0_i32_5 = arith.constant 0 : i32
    %9 = arith.cmpi ne, %8, %c0_i32_5 : i32
    scf.if %9 {
      %c128_i32 = arith.constant 128 : i32
      %10 = arith.muli %arg1, %c128_i32 : i32
      %11 = tpu.iota {dimensions = array<i32: 1>} : vector<256x128xi32>
      %12 = vector.broadcast %10 : i32 to vector<256x128xi32>
      %13 = arith.addi %12, %11 : vector<256x128xi32>
      %c100_i32 = arith.constant 100 : i32
      %14 = vector.broadcast %c100_i32 : i32 to vector<256x128xi32>
      %15 = arith.cmpi slt, %13, %14 : vector<256x128xi32>
      %cst_6 = arith.constant 3.40282347E+38 : f32
      %16 = vector.broadcast %cst_6 : f32 to vector<256x128xf32>
      %17 = arith.select %15, %3, %16 : vector<256x128xi1>, vector<256x128xf32>
      %c0_7 = arith.constant 0 : index
      %c0_8 = arith.constant 0 : index
      %18 = vector.load %arg4[%c0_7, %c0_8] : memref<256x128xf32, #tpu.memory_space<vmem>>, vector<256x128xf32>
      tpu.vector_store %arg4[%c0_7, %c0_8], %17 {strides = array<i32>} : memref<256x128xf32, #tpu.memory_space<vmem>>, vector<256x128xf32>,
    } else {
    }
    return
  }
  func.func @transform_0(%arg0: i32, %arg1: i32) -> (i32, i32, i32) {
    %c0_i32 = arith.constant 0 : i32
    %c0_i32_0 = arith.constant 0 : i32
    return %arg0, %c0_i32, %arg1 : i32, i32, i32
  }
  func.func @transform_1(%arg0: i32, %arg1: i32) -> (i32, i32) {
    %c0_i32 = arith.constant 0 : i32
    %c0_i32_0 = arith.constant 0 : i32
    %c0_i32_1 = arith.constant 0 : i32
    return %c0_i32, %c0_i32_0 : i32, i32
  }
  func.func @transform_2(%arg0: i32, %arg1: i32) -> (i32, i32) {
    %c1_i32 = arith.constant 1 : i32
    %0 = arith.muli %arg0, %c1_i32 : i32
    %1 = arith.addi %0, %arg1 : i32
    %c0_i32 = arith.constant 0 : i32
    %c0_i32_0 = arith.constant 0 : i32
    return %c0_i32, %1 : i32, i32
  }
}

module attributes {stable_mosaic.version = 11 : i64} {
  func.func @_l1_kernel(%arg0: i32, %arg1: i32, %arg2: memref<128x256xf32, #tpu.memory_space<vmem>>, %arg3: memref<128x256xf32, #tpu.memory_space<vmem>>, %arg4: memref<1x1x128x1xf32, #tpu.memory_space<vmem>>) attributes {dimension_semantics = [#tpu.dimension_semantics<parallel>, #tpu.dimension_semantics<parallel>], iteration_bounds = array<i64: 2, 1>, scalar_prefetch = 0 : i64, scratch_operands = 0 : i64, tpu.core_type = #tpu.core_type<tc>, window_params = [{transform_indices = @transform_0, window_bounds = array<i64: 128, 256>}, {transform_indices = @transform_1, window_bounds = array<i64: 128, 256>}, {transform_indices = @transform_2, window_bounds = array<i64: 1, 1, 128, 1>}]} {
    %c0 = arith.constant 0 : index
    %c0_0 = arith.constant 0 : index
    %0 = vector.load %arg2[%c0, %c0_0] : memref<128x256xf32, #tpu.memory_space<vmem>>, vector<128x256xf32>
    %c0_1 = arith.constant 0 : index
    %c0_2 = arith.constant 0 : index
    %1 = vector.load %arg3[%c0_1, %c0_2] : memref<128x256xf32, #tpu.memory_space<vmem>>, vector<128x256xf32>
    %2 = arith.subf %0, %1 : vector<128x256xf32>
    %3 = math.absf %2 : vector<128x256xf32>
    %cst = arith.constant dense<0.000000e+00> : vector<128xf32>
    %4 = vector.multi_reduction <add>, %3, %cst [1] : vector<128x256xf32> to vector<128xf32>
    %5 = vector.shape_cast %4 : vector<128xf32> to vector<128x1xf32>
    %6 = vector.shape_cast %5 : vector<128x1xf32> to vector<1x1x128x1xf32>
    %c0_3 = arith.constant 0 : index
    %c0_4 = arith.constant 0 : index
    %c0_5 = arith.constant 0 : index
    %c0_6 = arith.constant 0 : index
    %7 = vector.load %arg4[%c0_3, %c0_4, %c0_5, %c0_6] : memref<1x1x128x1xf32, #tpu.memory_space<vmem>>, vector<1x1x128x1xf32>
    tpu.vector_store %arg4[%c0_3, %c0_4, %c0_5, %c0_6], %6 {strides = array<i32>} : memref<1x1x128x1xf32, #tpu.memory_space<vmem>>, vector<1x1x128x1xf32>,
    return
  }
  func.func @transform_0(%arg0: i32, %arg1: i32) -> (i32, i32) {
    %c0_i32 = arith.constant 0 : i32
    return %arg0, %arg1 : i32, i32
  }
  func.func @transform_1(%arg0: i32, %arg1: i32) -> (i32, i32) {
    %c0_i32 = arith.constant 0 : i32
    return %arg0, %arg1 : i32, i32
  }
  func.func @transform_2(%arg0: i32, %arg1: i32) -> (i32, i32, i32, i32) {
    %c0_i32 = arith.constant 0 : i32
    %c0_i32_0 = arith.constant 0 : i32
    %c0_i32_1 = arith.constant 0 : i32
    return %arg0, %arg1, %c0_i32, %c0_i32_0 : i32, i32, i32, i32
  }
}

</mosaic_0001>

<llo_original>
// kernel: _patch_swd_forward.5
$region0: #{_patch_swd_forward.5}
  #allocation0 [shape = 'u32[]', space=smem, size = 0x4, offset = 0x4, fixed_abs, tag = 'smem constant byte address 0x4 - core index']
  #allocation1 [shape = 'u32[144,128]{1,0:T(1,128)}', space=vmem, size = 0x12000, scoped, tag = 'internal scratch']
  %s0 = inlined_call_operand.vmem [shape: f32[256,256], index: 0, kind: input, shape index: {}]
  %s1 = inlined_call_operand.vmem [shape: f32[256,256], index: 1, kind: input, shape index: {}]
  %s2 = inlined_call_operand.vmem [shape: f32[2,1,128,1], index: 2, kind: output, shape index: {}]
  %s3 = sld [smem:[#allocation0]]
  $region41: #{_patch_swd_forward.5} parent=0
    _
  %s5 = ssub.s32 1, %s3
  %s6 = scalar_select 0, %s5, %s3
  loop: start=0, step=1, limit=4
  $region2: #{_patch_swd_forward.5} parent=0 // loop_pre_header
    _
  $region3: #{_patch_swd_forward.5} parent=0 // loop_header
    %s8 = sphi 0, %s12
    %p9 = scmp.ge.s32.totalorder %s8, 4
    %s15 = sphi 0, %s27
    %s16 = sphi 0, %s23
    %s17 = sphi 0, %s15
    %s18 = sphi 0, %s16
    %s19 = sphi 0, %s17
    %s20 = sphi 0, %s18
    %s32 = sphi 0, %s34
    %s35 = sphi 0, %s32
    %s36 = sphi 0, %s35
    %s52 = sphi 0, %s36
    %s60 = sphi 0, %s62
    %s63 = sphi 0, %s60
    %s64 = sphi 0, %s63
    %s80 = sphi 0, %s64
    %s88 = sphi 0, %s90
    %s91 = sphi 0, %s88
    %s92 = sphi 0, %s91
    %s108 = sphi 0, %s92
  $region4: #{_patch_swd_forward.5} parent=0 // loop_header_branch
    %11 = sbr.rel (%p9) target = $region8
  $region5: #{_patch_swd_forward.5} parent=0 // loop_body
    %s13 = ssub.s32 %s8, 1
    %s14 = ssub.s32 %s8, 2
    %s21 = sadd.s32 1, %s16
    %p22 = scmp.ge.s32.totalorder %s21, 1
    %s23 = scalar_select %p22, 0, %s21
    %s24 = sadd.s32 1, %s15
    %s25 = scalar_select %p22, %s24, %s15
    %p26 = scmp.ge.s32.totalorder %s25, 2
    %s27 = scalar_select %p26, 0, %s25
    %s28 = ssub.s32 %s15, %s27
    %s29 = ssub.s32 %s16, %s23
    %s30 = sor.u32 %s28, %s29
    %p31 = scmp.eq.s32.totalorder %s30, 0
    %s33 = sadd.s32 %s32, 1
    %s34 = scalar_select %p31, %s32, %s33
    %p37 = pneg %p31
    %p38 = scmp.eq.s32.totalorder %s8, 1
    %p39 = por %p37, %p38
    %p40 = scmp.ne.s32.totalorder %s32, %s35
    %p41 = scmp.eq.s32.totalorder %s8, 0
    %p42 = por %p40, %p41
    %p43 = scmp.ne.s32.totalorder %s32, %s35
    %p44 = scmp.eq.s32.totalorder %s13, 1
    %p45 = por %p43, %p44
    %p46 = scmp.ne.s32.totalorder %s35, %s36
    %p47 = scmp.eq.s32.totalorder %s13, 0
    %p48 = por %p46, %p47
    %p49 = scmp.ne.s32.totalorder %s35, %s36
    %p50 = scmp.eq.s32.totalorder %s14, 1
    %p51 = por %p49, %p50
    %p53 = scmp.ne.s32.totalorder %s36, %s52
    %p54 = scmp.eq.s32.totalorder %s14, 0
    %p55 = por %p53, %p54
    %s56 = ssub.s32 %s15, %s27
    %s57 = ssub.s32 %s16, %s23
    %s58 = sor.u32 %s56, %s57
    %p59 = scmp.eq.s32.totalorder %s58, 0
    %s61 = sadd.s32 %s60, 1
    %s62 = scalar_select %p59, %s60, %s61
    %p65 = pneg %p59
    %p66 = scmp.eq.s32.totalorder %s8, 1
    %p67 = por %p65, %p66
    %p68 = scmp.ne.s32.totalorder %s60, %s63
    %p69 = scmp.eq.s32.totalorder %s8, 0
    %p70 = por %p68, %p69
    %p71 = scmp.ne.s32.totalorder %s60, %s63
    %p72 = scmp.eq.s32.totalorder %s13, 1
    %p73 = por %p71, %p72
    %p74 = scmp.ne.s32.totalorder %s63, %s64
    %p75 = scmp.eq.s32.totalorder %s13, 0
    %p76 = por %p74, %p75
    %p77 = scmp.ne.s32.totalorder %s63, %s64
    %p78 = scmp.eq.s32.totalorder %s14, 1
    %p79 = por %p77, %p78
    %p81 = scmp.ne.s32.totalorder %s64, %s80
    %p82 = scmp.eq.s32.totalorder %s14, 0
    %p83 = por %p81, %p82
    %s84 = ssub.s32 %s15, %s27
    %s85 = ssub.s32 %s16, %s23
    %s86 = sor.u32 %s84, %s85
    %p87 = scmp.eq.s32.totalorder %s86, 0
    %s89 = sadd.s32 %s88, 1
    %s90 = scalar_select %p87, %s88, %s89
    %p93 = pneg %p87
    %p94 = scmp.eq.s32.totalorder %s8, 1
    %p95 = por %p93, %p94
    %p96 = scmp.ne.s32.totalorder %s88, %s91
    %p97 = scmp.eq.s32.totalorder %s8, 0
    %p98 = por %p96, %p97
    %p99 = scmp.ne.s32.totalorder %s88, %s91
    %p100 = scmp.eq.s32.totalorder %s13, 1
    %p101 = por %p99, %p100
    %p102 = scmp.ne.s32.totalorder %s91, %s92
    %p103 = scmp.eq.s32.totalorder %s13, 0
    %p104 = por %p102, %p103
    %p105 = scmp.ne.s32.totalorder %s91, %s92
    %p106 = scmp.eq.s32.totalorder %s14, 1
    %p107 = por %p105, %p106
    %p109 = scmp.ne.s32.totalorder %s92, %s108
    %p110 = scmp.eq.s32.totalorder %s14, 0
    %p111 = por %p109, %p110
    %p112 = scmp.le.s32.totalorder 1, %s8
    %p113 = scmp.lt.s32.totalorder %s8, 3
    %p114 = pnand %p112, %p113
    %p115 = pneg %p114
    // Predicated region
    $region9: #{_patch_swd_forward.5} parent=5 // pred_check
      _
    $region10: #{_patch_swd_forward.5} parent=5 // pred_check_branch
      %117 = sbr.rel (%p114) target = $region12
    $region11: #{_patch_swd_forward.5} parent=5 // pred_region
      %s118 = ssub.s32 %s8, 1
    $region12: #{_patch_swd_forward.5} parent=5 // pred_fallthru
      _
    %p119 = scmp.lt.s32.totalorder %s8, 2
    // Predicated region
    $region13: #{_patch_swd_forward.5} parent=5 // pred_check
      %p120 = pneg %p119
    $region14: #{_patch_swd_forward.5} parent=5 // pred_check_branch
      %122 = sbr.rel (%p120) target = $region16
    $region15: #{_patch_swd_forward.5} parent=5 // pred_region
      // Predicated region
      $region17: #{_patch_swd_forward.5} parent=15 // pred_check
        %p123 = pneg %p42
      $region18: #{_patch_swd_forward.5} parent=15 // pred_check_branch
        %125 = sbr.rel (%p123) target = $region20
      $region19: #{_patch_swd_forward.5} parent=15 // pred_region
        %s126 = smul.u32 16, %s15
        %s127 = smul.u32 2, %s16
        %p128 = scmp.lt.s32.totalorder %s126, 31
        %s129 = scalar_select %p128, %s126, 31
        %p130 = scmp.lt.s32.totalorder %s127, 1
        %s131 = scalar_select %p130, %s127, 1
        %s132 = smul.addr %s129, 2
        %s133 = sadd.s32 %s131, %s132
        %s134 = smul.addr %s133, 8
        %s135 = scalar_lea.vmem %s0, %s134
        %s136 = smul.u32 16, %s15
        %s137 = smul.u32 2, %s16
      $region20: #{_patch_swd_forward.5} parent=15 // pred_fallthru
        _
      // Predicated region
      $region21: #{_patch_swd_forward.5} parent=15 // pred_check
        %p138 = pneg %p70
      $region22: #{_patch_swd_forward.5} parent=15 // pred_check_branch
        %140 = sbr.rel (%p138) target = $region24
      $region23: #{_patch_swd_forward.5} parent=15 // pred_region
        %s141 = smul.u32 16, %s15
        %s142 = smul.u32 2, %s16
        %p143 = scmp.lt.s32.totalorder %s141, 31
        %s144 = scalar_select %p143, %s141, 31
        %p145 = scmp.lt.s32.totalorder %s142, 1
        %s146 = scalar_select %p145, %s142, 1
        %s147 = smul.addr %s144, 2
        %s148 = sadd.s32 %s146, %s147
        %s149 = smul.addr %s148, 8
        %s150 = scalar_lea.vmem %s1, %s149
        %s151 = smul.u32 16, %s15
        %s152 = smul.u32 2, %s16
      $region24: #{_patch_swd_forward.5} parent=15 // pred_fallthru
        _
    $region16: #{_patch_swd_forward.5} parent=5 // pred_fallthru
      _
    %p153 = scmp.le.s32.totalorder 1, %s8
    %p154 = scmp.lt.s32.totalorder %s8, 3
    %p155 = pnand %p153, %p154
    %p156 = pneg %p155
    // Predicated region
    $region25: #{_patch_swd_forward.5} parent=5 // pred_check
      _
    $region26: #{_patch_swd_forward.5} parent=5 // pred_check_branch
      %158 = sbr.rel (%p155) target = $region28
    $region27: #{_patch_swd_forward.5} parent=5 // pred_region
      %s159 = ssub.s32 %s8, 1
      %s160 = smul.u32 16, %s17
      %s161 = smul.u32 2, %s18
      %p162 = scmp.lt.s32.totalorder %s160, 31
      %s163 = scalar_select %p162, %s160, 31
      %p164 = scmp.lt.s32.totalorder %s161, 1
      %s165 = scalar_select %p164, %s161, 1
      %s166 = smul.addr %s163, 2
      %s167 = sadd.s32 %s165, %s166
      %s168 = smul.addr %s167, 8
      %s169 = scalar_lea.vmem %s0, %s168
      %p170 = pneg %p48
      %p171 = pneg %p45
      %s172 = smul.u32 16, %s17
      %s173 = smul.u32 2, %s18
      %p174 = scmp.lt.s32.totalorder %s172, 31
      %s175 = scalar_select %p174, %s172, 31
      %p176 = scmp.lt.s32.totalorder %s173, 1
      %s177 = scalar_select %p176, %s173, 1
      %s178 = smul.addr %s175, 2
      %s179 = sadd.s32 %s177, %s178
      %s180 = smul.addr %s179, 8
      %s181 = scalar_lea.vmem %s1, %s180
      %p182 = pneg %p76
      %p183 = pneg %p73
      %p184 = pneg %p104
      %p185 = pneg %p101
      %p186 = scmp.lt.s32.totalorder %s17, 1
      %s187 = scalar_select %p186, %s17, 1
      %p188 = scmp.lt.s32.totalorder %s18, 0
      %s189 = scalar_select %p188, %s18, 0
      %s190 = smul.addr %s189, 16
      %s191 = smul.addr %s187, 16
      %s192 = sadd.s32 %s190, %s191
      %s193 = smul.addr %s192, 8
      %s194 = scalar_lea.vmem %s2, %s193
      %s195 = smul.u32 16, %s17
      %s196 = smul.u32 2, %s18
      %p197 = scmp.lt.s32.totalorder %s195, 31
      %s198 = scalar_select %p197, %s195, 31
      %p199 = scmp.lt.s32.totalorder %s196, 1
      %s200 = scalar_select %p199, %s196, 1
      %s201 = smul.addr %s198, 2
      %s202 = sadd.s32 %s200, %s201
      %s203 = smul.addr %s202, 8
      %s204 = scalar_lea.vmem %s0, %s203
      %s205 = smul.u32 16, %s17
      %s206 = smul.u32 2, %s18
      %s207 = smul.u32 16, %s17
      %s208 = smul.u32 2, %s18
      %p209 = scmp.lt.s32.totalorder %s207, 31
      %s210 = scalar_select %p209, %s207, 31
      %p211 = scmp.lt.s32.totalorder %s208, 1
      %s212 = scalar_select %p211, %s208, 1
      %s213 = smul.addr %s210, 2
      %s214 = sadd.s32 %s212, %s213
      %s215 = smul.addr %s214, 8
      %s216 = scalar_lea.vmem %s1, %s215
      %s217 = smul.u32 16, %s17
      %s218 = smul.u32 2, %s18
      %p219 = scmp.lt.s32.totalorder %s17, 1
      %s220 = scalar_select %p219, %s17, 1
      %p221 = scmp.lt.s32.totalorder %s18, 0
      %s222 = scalar_select %p221, %s18, 0
      %s223 = smul.addr %s222, 16
      %s224 = smul.addr %s220, 16
      %s225 = sadd.s32 %s223, %s224
      %s226 = smul.addr %s225, 8
      %s227 = scalar_lea.vmem %s2, %s226
      %v228 = vld [vmem:[%s204] sm:$0xff]
      %v229 = vld [vmem:[%s204 + $0x8] sm:$0xff]
      %v230 = vld [vmem:[%s204 + $0x10] sm:$0xff]
      %v231 = vld [vmem:[%s204 + $0x18] sm:$0xff]
      %v232 = vld [vmem:[%s204 + $0x20] sm:$0xff]
      %v233 = vld [vmem:[%s204 + $0x28] sm:$0xff]
      %v234 = vld [vmem:[%s204 + $0x30] sm:$0xff]
      %v235 = vld [vmem:[%s204 + $0x38] sm:$0xff]
      %v236 = vld [vmem:[%s204 + $0x40] sm:$0xff]
      %v237 = vld [vmem:[%s204 + $0x48] sm:$0xff]
      %v238 = vld [vmem:[%s204 + $0x50] sm:$0xff]
      %v239 = vld [vmem:[%s204 + $0x58] sm:$0xff]
      %v240 = vld [vmem:[%s204 + $0x60] sm:$0xff]
      %v241 = vld [vmem:[%s204 + $0x68] sm:$0xff]
      %v242 = vld [vmem:[%s204 + $0x70] sm:$0xff]
      %v243 = vld [vmem:[%s204 + $0x78] sm:$0xff]
      %v244 = vld [vmem:[%s204 + $0x80] sm:$0xff]
      %v245 = vld [vmem:[%s204 + $0x88] sm:$0xff]
      %v246 = vld [vmem:[%s204 + $0x90] sm:$0xff]
      %v247 = vld [vmem:[%s204 + $0x98] sm:$0xff]
      %v248 = vld [vmem:[%s204 + $0xa0] sm:$0xff]
      %v249 = vld [vmem:[%s204 + $0xa8] sm:$0xff]
      %v250 = vld [vmem:[%s204 + $0xb0] sm:$0xff]
      %v251 = vld [vmem:[%s204 + $0xb8] sm:$0xff]
      %v252 = vld [vmem:[%s204 + $0xc0] sm:$0xff]
      %v253 = vld [vmem:[%s204 + $0xc8] sm:$0xff]
      %v254 = vld [vmem:[%s204 + $0xd0] sm:$0xff]
      %v255 = vld [vmem:[%s204 + $0xd8] sm:$0xff]
      %v256 = vld [vmem:[%s204 + $0xe0] sm:$0xff]
      %v257 = vld [vmem:[%s204 + $0xe8] sm:$0xff]
      %v258 = vld [vmem:[%s204 + $0xf0] sm:$0xff]
      %v259 = vld [vmem:[%s204 + $0xf8] sm:$0xff]
      %v260 = vld [vmem:[%s216] sm:$0xff]
      %v261 = vld [vmem:[%s216 + $0x8] sm:$0xff]
      %v262 = vld [vmem:[%s216 + $0x10] sm:$0xff]
      %v263 = vld [vmem:[%s216 + $0x18] sm:$0xff]
      %v264 = vld [vmem:[%s216 + $0x20] sm:$0xff]
      %v265 = vld [vmem:[%s216 + $0x28] sm:$0xff]
      %v266 = vld [vmem:[%s216 + $0x30] sm:$0xff]
      %v267 = vld [vmem:[%s216 + $0x38] sm:$0xff]
      %v268 = vld [vmem:[%s216 + $0x40] sm:$0xff]
      %v269 = vld [vmem:[%s216 + $0x48] sm:$0xff]
      %v270 = vld [vmem:[%s216 + $0x50] sm:$0xff]
      %v271 = vld [vmem:[%s216 + $0x58] sm:$0xff]
      %v272 = vld [vmem:[%s216 + $0x60] sm:$0xff]
      %v273 = vld [vmem:[%s216 + $0x68] sm:$0xff]
      %v274 = vld [vmem:[%s216 + $0x70] sm:$0xff]
      %v275 = vld [vmem:[%s216 + $0x78] sm:$0xff]
      %v276 = vld [vmem:[%s216 + $0x80] sm:$0xff]
      %v277 = vld [vmem:[%s216 + $0x88] sm:$0xff]
      %v278 = vld [vmem:[%s216 + $0x90] sm:$0xff]
      %v279 = vld [vmem:[%s216 + $0x98] sm:$0xff]
      %v280 = vld [vmem:[%s216 + $0xa0] sm:$0xff]
      %v281 = vld [vmem:[%s216 + $0xa8] sm:$0xff]
      %v282 = vld [vmem:[%s216 + $0xb0] sm:$0xff]
      %v283 = vld [vmem:[%s216 + $0xb8] sm:$0xff]
      %v284 = vld [vmem:[%s216 + $0xc0] sm:$0xff]
      %v285 = vld [vmem:[%s216 + $0xc8] sm:$0xff]
      %v286 = vld [vmem:[%s216 + $0xd0] sm:$0xff]
      %v287 = vld [vmem:[%s216 + $0xd8] sm:$0xff]
      %v288 = vld [vmem:[%s216 + $0xe0] sm:$0xff]
      %v289 = vld [vmem:[%s216 + $0xe8] sm:$0xff]
      %v290 = vld [vmem:[%s216 + $0xf0] sm:$0xff]
      %v291 = vld [vmem:[%s216 + $0xf8] sm:$0xff]
      %v292 = vsub.f32 %v228, %v260
      %v293 = vsub.f32 %v229, %v261
      %v294 = vsub.f32 %v230, %v262
      %v295 = vsub.f32 %v231, %v263
      %v296 = vsub.f32 %v232, %v264
      %v297 = vsub.f32 %v233, %v265
      %v298 = vsub.f32 %v234, %v266
      %v299 = vsub.f32 %v235, %v267
      %v300 = vsub.f32 %v236, %v268
      %v301 = vsub.f32 %v237, %v269
      %v302 = vsub.f32 %v238, %v270
      %v303 = vsub.f32 %v239, %v271
      %v304 = vsub.f32 %v240, %v272
      %v305 = vsub.f32 %v241, %v273
      %v306 = vsub.f32 %v242, %v274
      %v307 = vsub.f32 %v243, %v275
      %v308 = vsub.f32 %v244, %v276
      %v309 = vsub.f32 %v245, %v277
      %v310 = vsub.f32 %v246, %v278
      %v311 = vsub.f32 %v247, %v279
      %v312 = vsub.f32 %v248, %v280
      %v313 = vsub.f32 %v249, %v281
      %v314 = vsub.f32 %v250, %v282
      %v315 = vsub.f32 %v251, %v283
      %v316 = vsub.f32 %v252, %v284
      %v317 = vsub.f32 %v253, %v285
      %v318 = vsub.f32 %v254, %v286
      %v319 = vsub.f32 %v255, %v287
      %v320 = vsub.f32 %v256, %v288
      %v321 = vsub.f32 %v257, %v289
      %v322 = vsub.f32 %v258, %v290
      %v323 = vsub.f32 %v259, %v291
      %v324 = vand.u32 2147483647, %v292
      %v325 = vand.u32 2147483647, %v293
      %v326 = vand.u32 2147483647, %v294
      %v327 = vand.u32 2147483647, %v295
      %v328 = vand.u32 2147483647, %v296
      %v329 = vand.u32 2147483647, %v297
      %v330 = vand.u32 2147483647, %v298
      %v331 = vand.u32 2147483647, %v299
      %v332 = vand.u32 2147483647, %v300
      %v333 = vand.u32 2147483647, %v301
      %v334 = vand.u32 2147483647, %v302
      %v335 = vand.u32 2147483647, %v303
      %v336 = vand.u32 2147483647, %v304
      %v337 = vand.u32 2147483647, %v305
      %v338 = vand.u32 2147483647, %v306
      %v339 = vand.u32 2147483647, %v307
      %v340 = vand.u32 2147483647, %v308
      %v341 = vand.u32 2147483647, %v309
      %v342 = vand.u32 2147483647, %v310
      %v343 = vand.u32 2147483647, %v311
      %v344 = vand.u32 2147483647, %v312
      %v345 = vand.u32 2147483647, %v313
      %v346 = vand.u32 2147483647, %v314
      %v347 = vand.u32 2147483647, %v315
      %v348 = vand.u32 2147483647, %v316
      %v349 = vand.u32 2147483647, %v317
      %v350 = vand.u32 2147483647, %v318
      %v351 = vand.u32 2147483647, %v319
      %v352 = vand.u32 2147483647, %v320
      %v353 = vand.u32 2147483647, %v321
      %v354 = vand.u32 2147483647, %v322
      %v355 = vand.u32 2147483647, %v323
      %v356 = vadd.f32 %v324, %v325
      %357 = vadd.xlane.f32.xlu0 %v356
      %v358 = vpop.xlane.xlu0 %357
      %v359 = vadd.f32 %v326, %v327
      %360 = vadd.xlane.f32.xlu0 %v359
      %v361 = vpop.xlane.xlu0 %360
      %v362 = vadd.f32 %v328, %v329
      %363 = vadd.xlane.f32.xlu0 %v362
      %v364 = vpop.xlane.xlu0 %363
      %v365 = vadd.f32 %v330, %v331
      %366 = vadd.xlane.f32.xlu0 %v365
      %v367 = vpop.xlane.xlu0 %366
      %v368 = vadd.f32 %v332, %v333
      %369 = vadd.xlane.f32.xlu0 %v368
      %v370 = vpop.xlane.xlu0 %369
      %v371 = vadd.f32 %v334, %v335
      %372 = vadd.xlane.f32.xlu0 %v371
      %v373 = vpop.xlane.xlu0 %372
      %v374 = vadd.f32 %v336, %v337
      %375 = vadd.xlane.f32.xlu0 %v374
      %v376 = vpop.xlane.xlu0 %375
      %v377 = vadd.f32 %v338, %v339
      %378 = vadd.xlane.f32.xlu0 %v377
      %v379 = vpop.xlane.xlu0 %378
      %v380 = vadd.f32 %v340, %v341
      %381 = vadd.xlane.f32.xlu0 %v380
      %v382 = vpop.xlane.xlu0 %381
      %v383 = vadd.f32 %v342, %v343
      %384 = vadd.xlane.f32.xlu0 %v383
      %v385 = vpop.xlane.xlu0 %384
      %v386 = vadd.f32 %v344, %v345
      %387 = vadd.xlane.f32.xlu0 %v386
      %v388 = vpop.xlane.xlu0 %387
      %v389 = vadd.f32 %v346, %v347
      %390 = vadd.xlane.f32.xlu0 %v389
      %v391 = vpop.xlane.xlu0 %390
      %v392 = vadd.f32 %v348, %v349
      %393 = vadd.xlane.f32.xlu0 %v392
      %v394 = vpop.xlane.xlu0 %393
      %v395 = vadd.f32 %v350, %v351
      %396 = vadd.xlane.f32.xlu0 %v395
      %v397 = vpop.xlane.xlu0 %396
      %v398 = vadd.f32 %v352, %v353
      %399 = vadd.xlane.f32.xlu0 %v398
      %v400 = vpop.xlane.xlu0 %399
      %v401 = vadd.f32 %v354, %v355
      %402 = vadd.xlane.f32.xlu0 %v401
      %v403 = vpop.xlane.xlu0 %402
      %vm404 = vcmask 7168
      %405 = vst.msk [vmem:[%s227] sm:$0xff] %vm404, %v358
      %406 = vst.msk [vmem:[%s227 + $0x8] sm:$0xff] %vm404, %v361
      %407 = vst.msk [vmem:[%s227 + $0x10] sm:$0xff] %vm404, %v364
      %408 = vst.msk [vmem:[%s227 + $0x18] sm:$0xff] %vm404, %v367
      %409 = vst.msk [vmem:[%s227 + $0x20] sm:$0xff] %vm404, %v370
      %410 = vst.msk [vmem:[%s227 + $0x28] sm:$0xff] %vm404, %v373
      %411 = vst.msk [vmem:[%s227 + $0x30] sm:$0xff] %vm404, %v376
      %412 = vst.msk [vmem:[%s227 + $0x38] sm:$0xff] %vm404, %v379
      %413 = vst.msk [vmem:[%s227 + $0x40] sm:$0xff] %vm404, %v382
      %414 = vst.msk [vmem:[%s227 + $0x48] sm:$0xff] %vm404, %v385
      %415 = vst.msk [vmem:[%s227 + $0x50] sm:$0xff] %vm404, %v388
      %416 = vst.msk [vmem:[%s227 + $0x58] sm:$0xff] %vm404, %v391
      %417 = vst.msk [vmem:[%s227 + $0x60] sm:$0xff] %vm404, %v394
      %418 = vst.msk [vmem:[%s227 + $0x68] sm:$0xff] %vm404, %v397
      %419 = vst.msk [vmem:[%s227 + $0x70] sm:$0xff] %vm404, %v400
      %420 = vst.msk [vmem:[%s227 + $0x78] sm:$0xff] %vm404, %v403
      %p421 = scmp.lt.s32.totalorder %s17, 1
      %s422 = scalar_select %p421, %s17, 1
      %p423 = scmp.lt.s32.totalorder %s18, 0
      %s424 = scalar_select %p423, %s18, 0
      %s425 = smul.addr %s424, 16
      %s426 = smul.addr %s422, 16
      %s427 = sadd.s32 %s425, %s426
      %s428 = smul.addr %s427, 8
      %s429 = scalar_lea.vmem %s2, %s428
      // Predicated region
      $region29: #{_patch_swd_forward.5} parent=27 // pred_check
        %p430 = pneg %p101
      $region30: #{_patch_swd_forward.5} parent=27 // pred_check_branch
        %432 = sbr.rel (%p430) target = $region32
      $region31: #{_patch_swd_forward.5} parent=27 // pred_region
        _
      $region32: #{_patch_swd_forward.5} parent=27 // pred_fallthru
        _
    $region28: #{_patch_swd_forward.5} parent=5 // pred_fallthru
      _
    %p433 = scmp.le.s32.totalorder 2, %s8
    // Predicated region
    $region33: #{_patch_swd_forward.5} parent=5 // pred_check
      %p434 = pneg %p433
    $region34: #{_patch_swd_forward.5} parent=5 // pred_check_branch
      %436 = sbr.rel (%p434) target = $region36
    $region35: #{_patch_swd_forward.5} parent=5 // pred_region
      %s437 = ssub.s32 %s8, 2
      // Predicated region
      $region37: #{_patch_swd_forward.5} parent=35 // pred_check
        %p438 = pneg %p107
      $region38: #{_patch_swd_forward.5} parent=35 // pred_check_branch
        %440 = sbr.rel (%p438) target = $region40
      $region39: #{_patch_swd_forward.5} parent=35 // pred_region
        %p441 = scmp.lt.s32.totalorder %s19, 1
        %s442 = scalar_select %p441, %s19, 1
        %p443 = scmp.lt.s32.totalorder %s20, 0
        %s444 = scalar_select %p443, %s20, 0
        %s445 = smul.addr %s444, 16
        %s446 = smul.addr %s442, 16
        %s447 = sadd.s32 %s445, %s446
        %s448 = smul.addr %s447, 8
        %s449 = scalar_lea.vmem %s2, %s448
      $region40: #{_patch_swd_forward.5} parent=35 // pred_fallthru
        _
    $region36: #{_patch_swd_forward.5} parent=5 // pred_fallthru
      _
  $region6: #{_patch_swd_forward.5} parent=0 // loop_footer
    %s12 = sadd.s32 1, %s8
  $region7: #{_patch_swd_forward.5} parent=0 // loop_footer_branch
    %7 = sbr.rel target = $region3
  $region8: #{_patch_swd_forward.5} parent=0 // loop_exit
    _

// kernel: _patch_swd_forward.3
$region0: #{_patch_swd_forward.3}
  #allocation0 [shape = 'u32[]', space=smem, size = 0x4, offset = 0x4, fixed_abs, tag = 'smem constant byte address 0x4 - core index']
  #allocation1 [shape = 'u32[144,128]{1,0:T(1,128)}', space=vmem, size = 0x12000, scoped, tag = 'internal scratch']
  %s0 = inlined_call_operand.vmem [shape: bf16[2,196,100], index: 0, kind: input, shape index: {}]
  %s1 = inlined_call_operand.vmem [shape: bf16[256,196], index: 1, kind: input, shape index: {}]
  %s2 = inlined_call_operand.vmem [shape: f32[256,256], index: 2, kind: output, shape index: {}]
  %s3 = sld [smem:[#allocation0]]
  $region83: #{_patch_swd_forward.3} parent=0
    _
  %s5 = ssub.s32 1, %s3
  %s6 = scalar_select 0, %s5, %s3
  $region1: #{_patch_swd_forward.3} parent=0
    #allocation2 [shape = 'u8[262144]{0}', space=vmem, size = 0x40000, scoped, tag = 'output window, operand 0']
    loop: start=0, step=1, limit=4
    $region2: #{_patch_swd_forward.3} parent=1 // loop_pre_header
      _
    $region3: #{_patch_swd_forward.3} parent=1 // loop_header
      %s8 = sphi 0, %s12
      %p9 = scmp.ge.s32.totalorder %s8, 4
      %s15 = sphi 0, %s27
      %s16 = sphi 0, %s23
      %s17 = sphi 0, %s15
      %s18 = sphi 0, %s16
      %s19 = sphi 0, %s17
      %s20 = sphi 0, %s18
      %s32 = sphi 0, %s34
      %s35 = sphi 0, %s32
      %s36 = sphi 0, %s35
      %s52 = sphi 0, %s36
      %s56 = sphi 0, %s56
      %s58 = sphi 0, %s56
      %s59 = sphi 0, %s58
      %s73 = sphi 0, %s59
      %s81 = sphi 0, %s83
      %s84 = sphi 0, %s81
      %s85 = sphi 0, %s84
      %s101 = sphi 0, %s85
    $region4: #{_patch_swd_forward.3} parent=1 // loop_header_branch
      %11 = sbr.rel (%p9) target = $region8
    $region5: #{_patch_swd_forward.3} parent=1 // loop_body
      %s13 = ssub.s32 %s8, 1
      %s14 = ssub.s32 %s8, 2
      %s21 = sadd.s32 1, %s16
      %p22 = scmp.ge.s32.totalorder %s21, 1
      %s23 = scalar_select %p22, 0, %s21
      %s24 = sadd.s32 1, %s15
      %s25 = scalar_select %p22, %s24, %s15
      %p26 = scmp.ge.s32.totalorder %s25, 2
      %s27 = scalar_select %p26, 0, %s25
      %s28 = ssub.s32 %s15, %s27
      %s29 = ssub.s32 %s16, %s23
      %s30 = sor.u32 %s28, %s29
      %p31 = scmp.eq.s32.totalorder %s30, 0
      %s33 = sadd.s32 %s32, 1
      %s34 = scalar_select %p31, %s32, %s33
      %p37 = pneg %p31
      %p38 = scmp.eq.s32.totalorder %s8, 1
      %p39 = por %p37, %p38
      %p40 = scmp.ne.s32.totalorder %s32, %s35
      %p41 = scmp.eq.s32.totalorder %s8, 0
      %p42 = por %p40, %p41
      %p43 = scmp.ne.s32.totalorder %s32, %s35
      %p44 = scmp.eq.s32.totalorder %s13, 1
      %p45 = por %p43, %p44
      %p46 = scmp.ne.s32.totalorder %s35, %s36
      %p47 = scmp.eq.s32.totalorder %s13, 0
      %p48 = por %p46, %p47
      %p49 = scmp.ne.s32.totalorder %s35, %s36
      %p50 = scmp.eq.s32.totalorder %s14, 1
      %p51 = por %p49, %p50
      %p53 = scmp.ne.s32.totalorder %s36, %s52
      %p54 = scmp.eq.s32.totalorder %s14, 0
      %p55 = por %p53, %p54
      %s57 = sadd.s32 %s56, 1
      %p60 = scmp.eq.s32.totalorder %s8, 1
      %p61 = scmp.ne.s32.totalorder %s56, %s58
      %p62 = scmp.eq.s32.totalorder %s8, 0
      %p63 = por %p61, %p62
      %p64 = scmp.ne.s32.totalorder %s56, %s58
      %p65 = scmp.eq.s32.totalorder %s13, 1
      %p66 = por %p64, %p65
      %p67 = scmp.ne.s32.totalorder %s58, %s59
      %p68 = scmp.eq.s32.totalorder %s13, 0
      %p69 = por %p67, %p68
      %p70 = scmp.ne.s32.totalorder %s58, %s59
      %p71 = scmp.eq.s32.totalorder %s14, 1
      %p72 = por %p70, %p71
      %p74 = scmp.ne.s32.totalorder %s59, %s73
      %p75 = scmp.eq.s32.totalorder %s14, 0
      %p76 = por %p74, %p75
      %s77 = sadd.s32 %s15, %s16
      %s78 = sadd.s32 %s27, %s23
      %s79 = ssub.s32 %s77, %s78
      %p80 = scmp.eq.s32.totalorder %s79, 0
      %s82 = sadd.s32 %s81, 1
      %s83 = scalar_select %p80, %s81, %s82
      %p86 = pneg %p80
      %p87 = scmp.eq.s32.totalorder %s8, 1
      %p88 = por %p86, %p87
      %p89 = scmp.ne.s32.totalorder %s81, %s84
      %p90 = scmp.eq.s32.totalorder %s8, 0
      %p91 = por %p89, %p90
      %p92 = scmp.ne.s32.totalorder %s81, %s84
      %p93 = scmp.eq.s32.totalorder %s13, 1
      %p94 = por %p92, %p93
      %p95 = scmp.ne.s32.totalorder %s84, %s85
      %p96 = scmp.eq.s32.totalorder %s13, 0
      %p97 = por %p95, %p96
      %p98 = scmp.ne.s32.totalorder %s84, %s85
      %p99 = scmp.eq.s32.totalorder %s14, 1
      %p100 = por %p98, %p99
      %p102 = scmp.ne.s32.totalorder %s85, %s101
      %p103 = scmp.eq.s32.totalorder %s14, 0
      %p104 = por %p102, %p103
      %p105 = scmp.le.s32.totalorder 1, %s8
      %p106 = scmp.lt.s32.totalorder %s8, 3
      %p107 = pnand %p105, %p106
      %p108 = pneg %p107
      // Predicated region
      $region9: #{_patch_swd_forward.3} parent=5 // pred_check
        _
      $region10: #{_patch_swd_forward.3} parent=5 // pred_check_branch
        %110 = sbr.rel (%p107) target = $region12
      $region11: #{_patch_swd_forward.3} parent=5 // pred_region
        %s111 = ssub.s32 %s8, 1
        // Predicated region
        $region13: #{_patch_swd_forward.3} parent=11 // pred_check
          %p112 = pneg %p69
        $region14: #{_patch_swd_forward.3} parent=11 // pred_check_branch
          %114 = sbr.rel (%p112) target = $region16
        $region15: #{_patch_swd_forward.3} parent=11 // pred_region
          _
        $region16: #{_patch_swd_forward.3} parent=11 // pred_fallthru
          _
      $region12: #{_patch_swd_forward.3} parent=5 // pred_fallthru
        _
      %p115 = scmp.lt.s32.totalorder %s8, 2
      // Predicated region
      $region17: #{_patch_swd_forward.3} parent=5 // pred_check
        %p116 = pneg %p115
      $region18: #{_patch_swd_forward.3} parent=5 // pred_check_branch
        %118 = sbr.rel (%p116) target = $region20
      $region19: #{_patch_swd_forward.3} parent=5 // pred_region
        // Predicated region
        $region21: #{_patch_swd_forward.3} parent=19 // pred_check
          %p119 = pneg %p42
        $region22: #{_patch_swd_forward.3} parent=19 // pred_check_branch
          %121 = sbr.rel (%p119) target = $region24
        $region23: #{_patch_swd_forward.3} parent=19 // pred_region
          %p122 = scmp.lt.s32.totalorder %s15, 1
          %s123 = scalar_select %p122, %s15, 1
          %p124 = scmp.lt.s32.totalorder %s16, 0
          %s125 = scalar_select %p124, %s16, 0
          %s126 = smul.addr %s123, 25
          %s127 = sadd.s32 %s125, %s126
          %s128 = smul.addr %s127, 4
          %s129 = scalar_lea.vmem %s0, %s128
        $region24: #{_patch_swd_forward.3} parent=19 // pred_fallthru
          _
      $region20: #{_patch_swd_forward.3} parent=5 // pred_fallthru
        _
      %p130 = scmp.le.s32.totalorder 1, %s8
      %p131 = scmp.lt.s32.totalorder %s8, 3
      %p132 = pnand %p130, %p131
      %p133 = pneg %p132
      // Predicated region
      $region25: #{_patch_swd_forward.3} parent=5 // pred_check
        _
      $region26: #{_patch_swd_forward.3} parent=5 // pred_check_branch
        %135 = sbr.rel (%p132) target = $region28
      $region27: #{_patch_swd_forward.3} parent=5 // pred_region
        %s136 = ssub.s32 %s8, 1
        %p137 = scmp.lt.s32.totalorder %s17, 1
        %s138 = scalar_select %p137, %s17, 1
        %p139 = scmp.lt.s32.totalorder %s18, 0
        %s140 = scalar_select %p139, %s18, 0
        %s141 = smul.addr %s138, 25
        %s142 = sadd.s32 %s140, %s141
        %s143 = smul.addr %s142, 4
        %s144 = scalar_lea.vmem %s0, %s143
        %p145 = pneg %p48
        %p146 = pneg %p45
        %p147 = pneg %p69
        %p148 = pneg %p66
        %p149 = pneg %p97
        %p150 = pneg %p94
        %s151 = sand.u32 %s84, 1
        %s152 = sand.u32 %s84, 1
        %s153 = smul.addr %s152, 256
        %s154 = scalar_lea.vmem [#allocation2], %s153
        %p155 = scmp.lt.s32.totalorder %s17, 1
        %s156 = scalar_select %p155, %s17, 1
        %p157 = scmp.lt.s32.totalorder %s18, 0
        %s158 = scalar_select %p157, %s18, 0
        %s159 = smul.addr %s156, 25
        %s160 = sadd.s32 %s158, %s159
        %s161 = smul.addr %s160, 4
        %s162 = scalar_lea.vmem %s0, %s161
        %s163 = sadd.s32 %s17, %s18
        %v165 = vld [vmem:[%s1] sm:$0xff]
        %v166 = vld [vmem:[%s1 + $0x8] sm:$0xff]
        %v167 = vld [vmem:[%s1 + $0x10] sm:$0xff]
        %v168 = vld [vmem:[%s1 + $0x18] sm:$0xff]
        %v169 = vld [vmem:[%s1 + $0x20] sm:$0xff]
        %v170 = vld [vmem:[%s1 + $0x28] sm:$0xff]
        %v171 = vld [vmem:[%s1 + $0x30] sm:$0xff]
        %v172 = vld [vmem:[%s1 + $0x38] sm:$0xff]
        %v173 = vld [vmem:[%s1 + $0x40] sm:$0xff]
        %v174 = vld [vmem:[%s1 + $0x48] sm:$0xff]
        %v175 = vld [vmem:[%s1 + $0x50] sm:$0xff]
        %v176 = vld [vmem:[%s1 + $0x58] sm:$0xff]
        %v177 = vld [vmem:[%s1 + $0x60] sm:$0xff]
        %v178 = vld [vmem:[%s1 + $0x68] sm:$0xff]
        %v179 = vld [vmem:[%s1 + $0x70] sm:$0xff]
        %v180 = vld [vmem:[%s1 + $0x78] sm:$0xff]
        %v181 = vld [vmem:[%s1 + $0x80] sm:$0xff]
        %v182 = vld [vmem:[%s1 + $0x88] sm:$0xff]
        %v183 = vld [vmem:[%s1 + $0x90] sm:$0xff]
        %v184 = vld [vmem:[%s1 + $0x98] sm:$0xff]
        %v185 = vld [vmem:[%s1 + $0xa0] sm:$0xff]
        %v186 = vld [vmem:[%s1 + $0xa8] sm:$0xff]
        %v187 = vld [vmem:[%s1 + $0xb0] sm:$0xff]
        %v188 = vld [vmem:[%s1 + $0xb8] sm:$0xff]
        %v189 = vld [vmem:[%s1 + $0xc0] sm:$0xff]
        %v190 = vld [vmem:[%s1 + $0xc8] sm:$0xff]
        %v191 = vld [vmem:[%s1 + $0xd0] sm:$0xff]
        %v192 = vld [vmem:[%s1 + $0xd8] sm:$0xff]
        %v193 = vld [vmem:[%s1 + $0xe0] sm:$0xff]
        %v194 = vld [vmem:[%s1 + $0xe8] sm:$0xff]
        %v195 = vld [vmem:[%s1 + $0xf0] sm:$0xff]
        %v196 = vld [vmem:[%s1 + $0xf8] sm:$0xff]
        %v197 = vld [vmem:[%s162] sm:$0xf]
        %v198 = vld [vmem:[%s162 + $0x4] sm:$0xf]
        %v199 = vld [vmem:[%s162 + $0x8] sm:$0xf]
        %v200 = vld [vmem:[%s162 + $0xc] sm:$0xf]
        %v201 = vld [vmem:[%s162 + $0x10] sm:$0xf]
        %v202 = vld [vmem:[%s162 + $0x14] sm:$0xf]
        %v203 = vld [vmem:[%s162 + $0x18] sm:$0xf]
        %v204 = vld [vmem:[%s162 + $0x1c] sm:$0xf]
        %v205 = vld [vmem:[%s162 + $0x20] sm:$0xf]
        %v206 = vld [vmem:[%s162 + $0x24] sm:$0xf]
        %v207 = vld [vmem:[%s162 + $0x28] sm:$0xf]
        %v208 = vld [vmem:[%s162 + $0x2c] sm:$0xf]
        %v209 = vld [vmem:[%s162 + $0x30] sm:$0xf]
        %v210 = vld [vmem:[%s162 + $0x34] sm:$0xf]
        %v211 = vld [vmem:[%s162 + $0x38] sm:$0xf]
        %v212 = vld [vmem:[%s162 + $0x3c] sm:$0xf]
        %v213 = vld [vmem:[%s162 + $0x40] sm:$0xf]
        %v214 = vld [vmem:[%s162 + $0x44] sm:$0xf]
        %v215 = vld [vmem:[%s162 + $0x48] sm:$0xf]
        %v216 = vld [vmem:[%s162 + $0x4c] sm:$0xf]
        %v217 = vld [vmem:[%s162 + $0x50] sm:$0xf]
        %v218 = vld [vmem:[%s162 + $0x54] sm:$0xf]
        %v219 = vld [vmem:[%s162 + $0x58] sm:$0xf]
        %v220 = vld [vmem:[%s162 + $0x5c] sm:$0xf]
        %v221 = vld [vmem:[%s162 + $0x60] sm:$0x3]
        %v254 = vunpack.c.l.b16 %v165
        %v255 = vunpack.c.h.b16 %v165
        %v256 = vunpack.c.l.b16 %v166
        %v257 = vunpack.c.h.b16 %v166
        %v258 = vunpack.c.l.b16 %v167
        %v259 = vunpack.c.h.b16 %v167
        %v260 = vunpack.c.l.b16 %v168
        %v261 = vunpack.c.h.b16 %v168
        %v262 = vunpack.c.l.b16 %v169
        %v263 = vunpack.c.h.b16 %v169
        %v264 = vunpack.c.l.b16 %v170
        %v265 = vunpack.c.h.b16 %v170
        %v266 = vunpack.c.l.b16 %v171
        %v267 = vunpack.c.h.b16 %v171
        %v268 = vunpack.c.l.b16 %v172
        %v269 = vunpack.c.h.b16 %v172
        %v270 = vunpack.c.l.b16 %v173
        %v271 = vunpack.c.h.b16 %v173
        %v272 = vunpack.c.l.b16 %v174
        %v273 = vunpack.c.h.b16 %v174
        %v274 = vunpack.c.l.b16 %v175
        %v275 = vunpack.c.h.b16 %v175
        %v276 = vunpack.c.l.b16 %v176
        %v277 = vunpack.c.h.b16 %v176
        %v278 = vunpack.c.l.b16 %v177
        %v279 = vunpack.c.h.b16 %v177
        %v280 = vunpack.c.l.b16 %v178
        %v281 = vunpack.c.h.b16 %v178
        %v282 = vunpack.c.l.b16 %v179
        %v283 = vunpack.c.h.b16 %v179
        %v284 = vunpack.c.l.b16 %v180
        %v285 = vunpack.c.h.b16 %v180
        %v286 = vunpack.c.l.b16 %v181
        %v287 = vunpack.c.h.b16 %v181
        %v288 = vunpack.c.l.b16 %v182
        %v289 = vunpack.c.h.b16 %v182
        %v290 = vunpack.c.l.b16 %v183
        %v291 = vunpack.c.h.b16 %v183
        %v292 = vunpack.c.l.b16 %v184
        %v293 = vunpack.c.h.b16 %v184
        %v294 = vunpack.c.l.b16 %v185
        %v295 = vunpack.c.h.b16 %v185
        %v296 = vunpack.c.l.b16 %v186
        %v297 = vunpack.c.h.b16 %v186
        %v298 = vunpack.c.l.b16 %v187
        %v299 = vunpack.c.h.b16 %v187
        %v300 = vunpack.c.l.b16 %v188
        %v301 = vunpack.c.h.b16 %v188
        %v302 = vunpack.c.l.b16 %v189
        %v303 = vunpack.c.h.b16 %v189
        %v304 = vunpack.c.l.b16 %v190
        %v305 = vunpack.c.h.b16 %v190
        %v306 = vunpack.c.l.b16 %v191
        %v307 = vunpack.c.h.b16 %v191
        %v308 = vunpack.c.l.b16 %v192
        %v309 = vunpack.c.h.b16 %v192
        %v310 = vunpack.c.l.b16 %v193
        %v311 = vunpack.c.h.b16 %v193
        %v312 = vunpack.c.l.b16 %v194
        %v313 = vunpack.c.h.b16 %v194
        %v314 = vunpack.c.l.b16 %v195
        %v315 = vunpack.c.h.b16 %v195
        %v316 = vunpack.c.l.b16 %v196
        %v317 = vunpack.c.h.b16 %v196
        %v318 = vpack.c.b16 %v256, %v254
        %v319 = vpack.c.b16 %v257, %v255
        %v320 = vpack.c.b16 %v260, %v258
        %v321 = vpack.c.b16 %v261, %v259
        %v322 = vpack.c.b16 %v264, %v262
        %v323 = vpack.c.b16 %v265, %v263
        %v324 = vpack.c.b16 %v268, %v266
        %v325 = vpack.c.b16 %v269, %v267
        %v326 = vpack.c.b16 %v272, %v270
        %v327 = vpack.c.b16 %v273, %v271
        %v328 = vpack.c.b16 %v276, %v274
        %v329 = vpack.c.b16 %v277, %v275
        %v330 = vpack.c.b16 %v280, %v278
        %v331 = vpack.c.b16 %v281, %v279
        %v332 = vpack.c.b16 %v284, %v282
        %v333 = vpack.c.b16 %v285, %v283
        %v334 = vpack.c.b16 %v288, %v286
        %v335 = vpack.c.b16 %v289, %v287
        %v336 = vpack.c.b16 %v292, %v290
        %v337 = vpack.c.b16 %v293, %v291
        %v338 = vpack.c.b16 %v296, %v294
        %v339 = vpack.c.b16 %v297, %v295
        %v340 = vpack.c.b16 %v300, %v298
        %v341 = vpack.c.b16 %v301, %v299
        %v342 = vpack.c.b16 %v304, %v302
        %v343 = vpack.c.b16 %v305, %v303
        %v344 = vpack.c.b16 %v308, %v306
        %v345 = vpack.c.b16 %v309, %v307
        %v346 = vpack.c.b16 %v312, %v310
        %v347 = vpack.c.b16 %v313, %v311
        %v348 = vpack.c.b16 %v316, %v314
        %v349 = vpack.c.b16 %v317, %v315
        %v391 = vunpack.c.l.b16 %v197
        %v392 = vunpack.c.l.b16 %v198
        %v393 = vunpack.c.l.b16 %v199
        %v394 = vunpack.c.l.b16 %v200
        %v395 = vunpack.c.l.b16 %v201
        %v396 = vunpack.c.l.b16 %v202
        %v397 = vunpack.c.l.b16 %v203
        %v398 = vunpack.c.l.b16 %v204
        %v399 = vunpack.c.l.b16 %v205
        %v400 = vunpack.c.l.b16 %v206
        %v401 = vunpack.c.l.b16 %v207
        %v402 = vunpack.c.l.b16 %v208
        %v403 = vunpack.c.l.b16 %v209
        %v404 = vunpack.c.l.b16 %v210
        %v405 = vunpack.c.l.b16 %v211
        %v406 = vunpack.c.l.b16 %v212
        %v407 = vunpack.c.l.b16 %v213
        %v408 = vunpack.c.l.b16 %v214
        %v409 = vunpack.c.l.b16 %v215
        %v410 = vunpack.c.l.b16 %v216
        %v411 = vunpack.c.l.b16 %v217
        %v412 = vunpack.c.l.b16 %v218
        %v413 = vunpack.c.l.b16 %v219
        %v414 = vunpack.c.l.b16 %v220
        %v415 = vunpack.c.l.b16 %v221
        %v416 = vpack.c.b16 %v392, %v391
        %v417 = vpack.c.b16 %v394, %v393
        %v418 = vpack.c.b16 %v396, %v395
        %v419 = vpack.c.b16 %v398, %v397
        %v420 = vpack.c.b16 %v400, %v399
        %v421 = vpack.c.b16 %v402, %v401
        %v422 = vpack.c.b16 %v404, %v403
        %v423 = vpack.c.b16 %v406, %v405
        %v424 = vpack.c.b16 %v408, %v407
        %v425 = vpack.c.b16 %v410, %v409
        %v426 = vpack.c.b16 %v412, %v411
        %v427 = vpack.c.b16 %v414, %v413
        %v428 = vpack.c.b16 %v415, %v415
        %vm441 = vcmask 556032
        %v443 = vsel %vm441, %v319, 0
        %v446 = vsel %vm441, %v321, 0
        %v449 = vsel %vm441, %v323, 0
        %v452 = vsel %vm441, %v325, 0
        %v455 = vsel %vm441, %v327, 0
        %v458 = vsel %vm441, %v329, 0
        %v461 = vsel %vm441, %v331, 0
        %v464 = vsel %vm441, %v333, 0
        %v467 = vsel %vm441, %v335, 0
        %v470 = vsel %vm441, %v337, 0
        %v473 = vsel %vm441, %v339, 0
        %v476 = vsel %vm441, %v341, 0
        %v479 = vsel %vm441, %v343, 0
        %v482 = vsel %vm441, %v345, 0
        %v485 = vsel %vm441, %v347, 0
        %v488 = vsel %vm441, %v349, 0
        %vm490 = vcmask 1041408
        %v492 = vsel %vm490, %v428, 0
        %494 = vmatprep.subr.bf16.mxu0 0
        %495 = vmatpush1.bf16.msra.mxu0 %v423
        %496 = vmatprep.subr.bf16.mxu0 0
        %497 = vmatpush1.bf16.msra.mxu0 %v422
        %498 = vmatprep.subr.bf16.mxu0 0
        %499 = vmatpush1.bf16.msra.mxu0 %v421
        %500 = vmatprep.subr.bf16.mxu0 0
        %501 = vmatpush1.bf16.msra.mxu0 %v420
        %502 = vmatprep.subr.bf16.mxu0 0
        %503 = vmatpush1.bf16.msra.mxu0 %v419
        %504 = vmatprep.subr.bf16.mxu0 0
        %505 = vmatpush1.bf16.msra.mxu0 %v418
        %506 = vmatprep.subr.bf16.mxu0 0
        %507 = vmatpush1.bf16.msra.mxu0 %v417
        %508 = vmatprep.subr.bf16.mxu0 0
        %509 = vmatpush1.bf16.msra.mxu0 %v416
        %510 = vmatprep.subr.bf16.mxu0 0
        %511 = vmatpush2.bf16.msra.mxu0 0
        %512 = vmatprep.subr.bf16.mxu0 0
        %513 = vmatpush2.bf16.msra.mxu0 0
        %514 = vmatprep.subr.bf16.mxu0 0
        %515 = vmatpush2.bf16.msra.mxu0 0
        %516 = vmatprep.subr.bf16.mxu0 0
        %517 = vmatpush2.bf16.msra.mxu0 %v492
        %518 = vmatprep.subr.bf16.mxu0 0
        %519 = vmatpush2.bf16.msra.mxu0 %v427
        %520 = vmatprep.subr.bf16.mxu0 0
        %521 = vmatpush2.bf16.msra.mxu0 %v426
        %522 = vmatprep.subr.bf16.mxu0 0
        %523 = vmatpush2.bf16.msra.mxu0 %v425
        %524 = vmatprep.subr.bf16.mxu0 0
        %525 = vmatpush2.bf16.msra.mxu0 %v424
        %526 = vmatprep.mubr.bf16.mxu0 %v443
        %527 = vmatmul.mubr.bf16.gmra.mxu0 %v318
        %v528 = vpop.f32.mrf.mxu0
        %v529 = vadd.f32 0.0, %v528
        %v530 = vpop.f32.mrf.mxu0
        %v531 = vpop.f32.mrf.mxu0
        %v532 = vadd.f32 0.0, %v531
        %v533 = vpop.f32.mrf.mxu0
        %534 = vmatprep.mubr.bf16.mxu0 %v446
        %535 = vmatmul.mubr.bf16.gmra.mxu0 %v320
        %v536 = vpop.f32.mrf.mxu0
        %v537 = vadd.f32 0.0, %v536
        %v538 = vpop.f32.mrf.mxu0
        %v539 = vpop.f32.mrf.mxu0
        %v540 = vadd.f32 0.0, %v539
        %v541 = vpop.f32.mrf.mxu0
        %542 = vmatprep.mubr.bf16.mxu0 %v449
        %543 = vmatmul.mubr.bf16.gmra.mxu0 %v322
        %v544 = vpop.f32.mrf.mxu0
        %v545 = vadd.f32 0.0, %v544
        %v546 = vpop.f32.mrf.mxu0
        %v547 = vpop.f32.mrf.mxu0
        %v548 = vadd.f32 0.0, %v547
        %v549 = vpop.f32.mrf.mxu0
        %550 = vmatprep.mubr.bf16.mxu0 %v452
        %551 = vmatmul.mubr.bf16.gmra.mxu0 %v324
        %v552 = vpop.f32.mrf.mxu0
        %v553 = vadd.f32 0.0, %v552
        %v554 = vpop.f32.mrf.mxu0
        %v555 = vpop.f32.mrf.mxu0
        %v556 = vadd.f32 0.0, %v555
        %v557 = vpop.f32.mrf.mxu0
        %558 = vmatprep.mubr.bf16.mxu0 %v455
        %559 = vmatmul.mubr.bf16.gmra.mxu0 %v326
        %v560 = vpop.f32.mrf.mxu0
        %v561 = vadd.f32 0.0, %v560
        %v562 = vpop.f32.mrf.mxu0
        %v563 = vpop.f32.mrf.mxu0
        %v564 = vadd.f32 0.0, %v563
        %v565 = vpop.f32.mrf.mxu0
        %566 = vmatprep.mubr.bf16.mxu0 %v458
        %567 = vmatmul.mubr.bf16.gmra.mxu0 %v328
        %v568 = vpop.f32.mrf.mxu0
        %v569 = vadd.f32 0.0, %v568
        %v570 = vpop.f32.mrf.mxu0
        %v571 = vpop.f32.mrf.mxu0
        %v572 = vadd.f32 0.0, %v571
        %v573 = vpop.f32.mrf.mxu0
        %574 = vmatprep.mubr.bf16.mxu0 %v461
        %575 = vmatmul.mubr.bf16.gmra.mxu0 %v330
        %v576 = vpop.f32.mrf.mxu0
        %v577 = vadd.f32 0.0, %v576
        %v578 = vpop.f32.mrf.mxu0
        %v579 = vpop.f32.mrf.mxu0
        %v580 = vadd.f32 0.0, %v579
        %v581 = vpop.f32.mrf.mxu0
        %582 = vmatprep.mubr.bf16.mxu0 %v464
        %583 = vmatmul.mubr.bf16.gmra.mxu0 %v332
        %v584 = vpop.f32.mrf.mxu0
        %v585 = vadd.f32 0.0, %v584
        %v586 = vpop.f32.mrf.mxu0
        %v587 = vpop.f32.mrf.mxu0
        %v588 = vadd.f32 0.0, %v587
        %v589 = vpop.f32.mrf.mxu0
        %590 = vmatprep.mubr.bf16.mxu0 %v467
        %591 = vmatmul.mubr.bf16.gmra.mxu0 %v334
        %v592 = vpop.f32.mrf.mxu0
        %v593 = vadd.f32 0.0, %v592
        %v594 = vpop.f32.mrf.mxu0
        %v595 = vpop.f32.mrf.mxu0
        %v596 = vadd.f32 0.0, %v595
        %v597 = vpop.f32.mrf.mxu0
        %598 = vmatprep.mubr.bf16.mxu0 %v470
        %599 = vmatmul.mubr.bf16.gmra.mxu0 %v336
        %v600 = vpop.f32.mrf.mxu0
        %v601 = vadd.f32 0.0, %v600
        %v602 = vpop.f32.mrf.mxu0
        %v603 = vpop.f32.mrf.mxu0
        %v604 = vadd.f32 0.0, %v603
        %v605 = vpop.f32.mrf.mxu0
        %606 = vmatprep.mubr.bf16.mxu0 %v473
        %607 = vmatmul.mubr.bf16.gmra.mxu0 %v338
        %v608 = vpop.f32.mrf.mxu0
        %v609 = vadd.f32 0.0, %v608
        %v610 = vpop.f32.mrf.mxu0
        %v611 = vpop.f32.mrf.mxu0
        %v612 = vadd.f32 0.0, %v611
        %v613 = vpop.f32.mrf.mxu0
        %614 = vmatprep.mubr.bf16.mxu0 %v476
        %615 = vmatmul.mubr.bf16.gmra.mxu0 %v340
        %v616 = vpop.f32.mrf.mxu0
        %v617 = vadd.f32 0.0, %v616
        %v618 = vpop.f32.mrf.mxu0
        %v619 = vpop.f32.mrf.mxu0
        %v620 = vadd.f32 0.0, %v619
        %v621 = vpop.f32.mrf.mxu0
        %622 = vmatprep.mubr.bf16.mxu0 %v479
        %623 = vmatmul.mubr.bf16.gmra.mxu0 %v342
        %v624 = vpop.f32.mrf.mxu0
        %v625 = vadd.f32 0.0, %v624
        %v626 = vpop.f32.mrf.mxu0
        %v627 = vpop.f32.mrf.mxu0
        %v628 = vadd.f32 0.0, %v627
        %v629 = vpop.f32.mrf.mxu0
        %630 = vmatprep.mubr.bf16.mxu0 %v482
        %631 = vmatmul.mubr.bf16.gmra.mxu0 %v344
        %v632 = vpop.f32.mrf.mxu0
        %v633 = vadd.f32 0.0, %v632
        %v634 = vpop.f32.mrf.mxu0
        %v635 = vpop.f32.mrf.mxu0
        %v636 = vadd.f32 0.0, %v635
        %v637 = vpop.f32.mrf.mxu0
        %638 = vmatprep.mubr.bf16.mxu0 %v485
        %639 = vmatmul.mubr.bf16.gmra.mxu0 %v346
        %v640 = vpop.f32.mrf.mxu0
        %v641 = vadd.f32 0.0, %v640
        %v642 = vpop.f32.mrf.mxu0
        %v643 = vpop.f32.mrf.mxu0
        %v644 = vadd.f32 0.0, %v643
        %v645 = vpop.f32.mrf.mxu0
        %646 = vmatprep.mubr.bf16.mxu0 %v488
        %647 = vmatmul.mubr.bf16.gmra.mxu0 %v348
        %v648 = vpop.f32.mrf.mxu0
        %v649 = vadd.f32 0.0, %v648
        %v650 = vpop.f32.mrf.mxu0
        %v651 = vpop.f32.mrf.mxu0
        %v652 = vadd.f32 0.0, %v651
        %v653 = vpop.f32.mrf.mxu0
        %654 = vdwg.mxu0
        %p655 = scmp.eq.s32.totalorder %s18, 0
        %p656 = scmp.ne.s32.totalorder %s18, 0
        // Predicated region
        $region29: #{_patch_swd_forward.3} parent=27 // pred_check
          %p657 = pneg %p656
        $region30: #{_patch_swd_forward.3} parent=27 // pred_check_branch
          %659 = sbr.rel (%p657) target = $region32
        $region31: #{_patch_swd_forward.3} parent=27 // pred_region
          %660 = vst [vmem:[%s154] sm:$0xff] %v529
          %661 = vst [vmem:[%s154 + $0x8] sm:$0xff] %v532
          %662 = vst [vmem:[%s154 + $0x10] sm:$0xff] %v537
          %663 = vst [vmem:[%s154 + $0x18] sm:$0xff] %v540
          %664 = vst [vmem:[%s154 + $0x20] sm:$0xff] %v545
          %665 = vst [vmem:[%s154 + $0x28] sm:$0xff] %v548
          %666 = vst [vmem:[%s154 + $0x30] sm:$0xff] %v553
          %667 = vst [vmem:[%s154 + $0x38] sm:$0xff] %v556
          %668 = vst [vmem:[%s154 + $0x40] sm:$0xff] %v561
          %669 = vst [vmem:[%s154 + $0x48] sm:$0xff] %v564
          %670 = vst [vmem:[%s154 + $0x50] sm:$0xff] %v569
          %671 = vst [vmem:[%s154 + $0x58] sm:$0xff] %v572
          %672 = vst [vmem:[%s154 + $0x60] sm:$0xff] %v577
          %673 = vst [vmem:[%s154 + $0x68] sm:$0xff] %v580
          %674 = vst [vmem:[%s154 + $0x70] sm:$0xff] %v585
          %675 = vst [vmem:[%s154 + $0x78] sm:$0xff] %v588
          %676 = vst [vmem:[%s154 + $0x80] sm:$0xff] %v593
          %677 = vst [vmem:[%s154 + $0x88] sm:$0xff] %v596
          %678 = vst [vmem:[%s154 + $0x90] sm:$0xff] %v601
          %679 = vst [vmem:[%s154 + $0x98] sm:$0xff] %v604
          %680 = vst [vmem:[%s154 + $0xa0] sm:$0xff] %v609
          %681 = vst [vmem:[%s154 + $0xa8] sm:$0xff] %v612
          %682 = vst [vmem:[%s154 + $0xb0] sm:$0xff] %v617
          %683 = vst [vmem:[%s154 + $0xb8] sm:$0xff] %v620
          %684 = vst [vmem:[%s154 + $0xc0] sm:$0xff] %v625
          %685 = vst [vmem:[%s154 + $0xc8] sm:$0xff] %v628
          %686 = vst [vmem:[%s154 + $0xd0] sm:$0xff] %v633
          %687 = vst [vmem:[%s154 + $0xd8] sm:$0xff] %v636
          %688 = vst [vmem:[%s154 + $0xe0] sm:$0xff] %v641
          %689 = vst [vmem:[%s154 + $0xe8] sm:$0xff] %v644
          %690 = vst [vmem:[%s154 + $0xf0] sm:$0xff] %v649
          %691 = vst [vmem:[%s154 + $0xf8] sm:$0xff] %v652
        $region32: #{_patch_swd_forward.3} parent=27 // pred_fallthru
          _
        // Predicated region
        $region33: #{_patch_swd_forward.3} parent=27 // pred_check
          %p692 = pneg %p655
        $region34: #{_patch_swd_forward.3} parent=27 // pred_check_branch
          %694 = sbr.rel (%p692) target = $region36
        $region35: #{_patch_swd_forward.3} parent=27 // pred_region
          %s695 = smul.u32 %s18, 128
          %v696 = vlaneseq
          %v697 = vand.u32 %v696, 127
          %v698 = vstv %s695
          %v699 = vadd.s32 %v698, %v697
          %vm700 = vcmp.lt.s32.totalorder %v699, 100
          %v701 = vsel %vm700, %v529, 3.4028235e+38
          %v702 = vsel %vm700, %v532, 3.4028235e+38
          %v703 = vsel %vm700, %v537, 3.4028235e+38
          %v704 = vsel %vm700, %v540, 3.4028235e+38
          %v705 = vsel %vm700, %v545, 3.4028235e+38
          %v706 = vsel %vm700, %v548, 3.4028235e+38
          %v707 = vsel %vm700, %v553, 3.4028235e+38
          %v708 = vsel %vm700, %v556, 3.4028235e+38
          %v709 = vsel %vm700, %v561, 3.4028235e+38
          %v710 = vsel %vm700, %v564, 3.4028235e+38
          %v711 = vsel %vm700, %v569, 3.4028235e+38
          %v712 = vsel %vm700, %v572, 3.4028235e+38
          %v713 = vsel %vm700, %v577, 3.4028235e+38
          %v714 = vsel %vm700, %v580, 3.4028235e+38
          %v715 = vsel %vm700, %v585, 3.4028235e+38
          %v716 = vsel %vm700, %v588, 3.4028235e+38
          %v717 = vsel %vm700, %v593, 3.4028235e+38
          %v718 = vsel %vm700, %v596, 3.4028235e+38
          %v719 = vsel %vm700, %v601, 3.4028235e+38
          %v720 = vsel %vm700, %v604, 3.4028235e+38
          %v721 = vsel %vm700, %v609, 3.4028235e+38
          %v722 = vsel %vm700, %v612, 3.4028235e+38
          %v723 = vsel %vm700, %v617, 3.4028235e+38
          %v724 = vsel %vm700, %v620, 3.4028235e+38
          %v725 = vsel %vm700, %v625, 3.4028235e+38
          %v726 = vsel %vm700, %v628, 3.4028235e+38
          %v727 = vsel %vm700, %v633, 3.4028235e+38
          %v728 = vsel %vm700, %v636, 3.4028235e+38
          %v729 = vsel %vm700, %v641, 3.4028235e+38
          %v730 = vsel %vm700, %v644, 3.4028235e+38
          %v731 = vsel %vm700, %v649, 3.4028235e+38
          %v732 = vsel %vm700, %v652, 3.4028235e+38
          %733 = vst [vmem:[%s154] sm:$0xff] %v701
          %734 = vst [vmem:[%s154 + $0x8] sm:$0xff] %v702
          %735 = vst [vmem:[%s154 + $0x10] sm:$0xff] %v703
          %736 = vst [vmem:[%s154 + $0x18] sm:$0xff] %v704
          %737 = vst [vmem:[%s154 + $0x20] sm:$0xff] %v705
          %738 = vst [vmem:[%s154 + $0x28] sm:$0xff] %v706
          %739 = vst [vmem:[%s154 + $0x30] sm:$0xff] %v707
          %740 = vst [vmem:[%s154 + $0x38] sm:$0xff] %v708
          %741 = vst [vmem:[%s154 + $0x40] sm:$0xff] %v709
          %742 = vst [vmem:[%s154 + $0x48] sm:$0xff] %v710
          %743 = vst [vmem:[%s154 + $0x50] sm:$0xff] %v711
          %744 = vst [vmem:[%s154 + $0x58] sm:$0xff] %v712
          %745 = vst [vmem:[%s154 + $0x60] sm:$0xff] %v713
          %746 = vst [vmem:[%s154 + $0x68] sm:$0xff] %v714
          %747 = vst [vmem:[%s154 + $0x70] sm:$0xff] %v715
          %748 = vst [vmem:[%s154 + $0x78] sm:$0xff] %v716
          %749 = vst [vmem:[%s154 + $0x80] sm:$0xff] %v717
          %750 = vst [vmem:[%s154 + $0x88] sm:$0xff] %v718
          %751 = vst [vmem:[%s154 + $0x90] sm:$0xff] %v719
          %752 = vst [vmem:[%s154 + $0x98] sm:$0xff] %v720
          %753 = vst [vmem:[%s154 + $0xa0] sm:$0xff] %v721
          %754 = vst [vmem:[%s154 + $0xa8] sm:$0xff] %v722
          %755 = vst [vmem:[%s154 + $0xb0] sm:$0xff] %v723
          %756 = vst [vmem:[%s154 + $0xb8] sm:$0xff] %v724
          %757 = vst [vmem:[%s154 + $0xc0] sm:$0xff] %v725
          %758 = vst [vmem:[%s154 + $0xc8] sm:$0xff] %v726
          %759 = vst [vmem:[%s154 + $0xd0] sm:$0xff] %v727
          %760 = vst [vmem:[%s154 + $0xd8] sm:$0xff] %v728
          %761 = vst [vmem:[%s154 + $0xe0] sm:$0xff] %v729
          %762 = vst [vmem:[%s154 + $0xe8] sm:$0xff] %v730
          %763 = vst [vmem:[%s154 + $0xf0] sm:$0xff] %v731
          %764 = vst [vmem:[%s154 + $0xf8] sm:$0xff] %v732
        $region36: #{_patch_swd_forward.3} parent=27 // pred_fallthru
          _
        %s765 = sand.u32 %s84, 1
        %s766 = sand.u32 %s84, 1
        %s767 = smul.addr %s766, 256
        %s768 = scalar_lea.vmem [#allocation2], %s767
        // Predicated region
        $region37: #{_patch_swd_forward.3} parent=27 // pred_check
          %p769 = pneg %p94
        $region38: #{_patch_swd_forward.3} parent=27 // pred_check_branch
          %771 = sbr.rel (%p769) target = $region40
        $region39: #{_patch_swd_forward.3} parent=27 // pred_region
          %s772 = sadd.s32 %s17, %s18
          %s773 = smul.addr %s772, 8
          %s774 = scalar_lea.vmem %s2, %s773
          // Predicated region
          $region41: #{_patch_swd_forward.3} parent=39 // pred_check
            _
          $region42: #{_patch_swd_forward.3} parent=39 // pred_check_branch
            %776 = sbr.rel (0) target = $region44
          $region43: #{_patch_swd_forward.3} parent=39 // pred_region
            // Predicated region
            $region45: #{_patch_swd_forward.3} parent=43 // pred_check
              _
            $region46: #{_patch_swd_forward.3} parent=43 // pred_check_branch
              %778 = sbr.rel (0) target = $region48
            $region47: #{_patch_swd_forward.3} parent=43 // pred_region
              // Predicated region
              $region60: #{_patch_swd_forward.3} parent=47 // pred_check
                _
              $region61: #{_patch_swd_forward.3} parent=47 // pred_check_branch
                %856 = sbr.rel (0) target = $region63
              $region62: #{_patch_swd_forward.3} parent=47 // pred_region
                loop: start=0, step=1, limit=1
                $region64: #{_patch_swd_forward.3} parent=62 // loop_pre_header
                  _
                $region65: #{_patch_swd_forward.3} parent=62 // loop_header
                  %s858 = sphi 0, %s862
                  %p859 = scmp.ge.s32.totalorder %s858, 1
                  %s863 = sphi %s768, %s768
                  %s864 = sphi %s774, %s774
                $region66: #{_patch_swd_forward.3} parent=62 // loop_header_branch
                  %861 = sbr.rel (%p859) target = $region70
                $region67: #{_patch_swd_forward.3} parent=62 // loop_body
                  %v865 = vld [vmem:[%s863] sm:$0xff]
                  %866 = vst [vmem:[%s864] sm:$0xff] %v865
                  %v867 = vld [vmem:[%s863 + $0x8] sm:$0xff]
                  %868 = vst [vmem:[%s864 + $0x10] sm:$0xff] %v867
                  %v869 = vld [vmem:[%s863 + $0x10] sm:$0xff]
                  %870 = vst [vmem:[%s864 + $0x20] sm:$0xff] %v869
                  %v871 = vld [vmem:[%s863 + $0x18] sm:$0xff]
                  %872 = vst [vmem:[%s864 + $0x30] sm:$0xff] %v871
                  %v873 = vld [vmem:[%s863 + $0x20] sm:$0xff]
                  %874 = vst [vmem:[%s864 + $0x40] sm:$0xff] %v873
                  %v875 = vld [vmem:[%s863 + $0x28] sm:$0xff]
                  %876 = vst [vmem:[%s864 + $0x50] sm:$0xff] %v875
                  %v877 = vld [vmem:[%s863 + $0x30] sm:$0xff]
                  %878 = vst [vmem:[%s864 + $0x60] sm:$0xff] %v877
                  %v879 = vld [vmem:[%s863 + $0x38] sm:$0xff]
                  %880 = vst [vmem:[%s864 + $0x70] sm:$0xff] %v879
                  %v881 = vld [vmem:[%s863 + $0x40] sm:$0xff]
                  %882 = vst [vmem:[%s864 + $0x80] sm:$0xff] %v881
                  %v883 = vld [vmem:[%s863 + $0x48] sm:$0xff]
                  %884 = vst [vmem:[%s864 + $0x90] sm:$0xff] %v883
                  %v885 = vld [vmem:[%s863 + $0x50] sm:$0xff]
                  %886 = vst [vmem:[%s864 + $0xa0] sm:$0xff] %v885
                  %v887 = vld [vmem:[%s863 + $0x58] sm:$0xff]
                  %888 = vst [vmem:[%s864 + $0xb0] sm:$0xff] %v887
                  %v889 = vld [vmem:[%s863 + $0x60] sm:$0xff]
                  %890 = vst [vmem:[%s864 + $0xc0] sm:$0xff] %v889
                  %v891 = vld [vmem:[%s863 + $0x68] sm:$0xff]
                  %892 = vst [vmem:[%s864 + $0xd0] sm:$0xff] %v891
                  %v893 = vld [vmem:[%s863 + $0x70] sm:$0xff]
                  %894 = vst [vmem:[%s864 + $0xe0] sm:$0xff] %v893
                  %v895 = vld [vmem:[%s863 + $0x78] sm:$0xff]
                  %896 = vst [vmem:[%s864 + $0xf0] sm:$0xff] %v895
                  %v897 = vld [vmem:[%s863 + $0x80] sm:$0xff]
                  %898 = vst [vmem:[%s864 + $0x100] sm:$0xff] %v897
                  %v899 = vld [vmem:[%s863 + $0x88] sm:$0xff]
                  %900 = vst [vmem:[%s864 + $0x110] sm:$0xff] %v899
                  %v901 = vld [vmem:[%s863 + $0x90] sm:$0xff]
                  %902 = vst [vmem:[%s864 + $0x120] sm:$0xff] %v901
                  %v903 = vld [vmem:[%s863 + $0x98] sm:$0xff]
                  %904 = vst [vmem:[%s864 + $0x130] sm:$0xff] %v903
                  %v905 = vld [vmem:[%s863 + $0xa0] sm:$0xff]
                  %906 = vst [vmem:[%s864 + $0x140] sm:$0xff] %v905
                  %v907 = vld [vmem:[%s863 + $0xa8] sm:$0xff]
                  %908 = vst [vmem:[%s864 + $0x150] sm:$0xff] %v907
                  %v909 = vld [vmem:[%s863 + $0xb0] sm:$0xff]
                  %910 = vst [vmem:[%s864 + $0x160] sm:$0xff] %v909
                  %v911 = vld [vmem:[%s863 + $0xb8] sm:$0xff]
                  %912 = vst [vmem:[%s864 + $0x170] sm:$0xff] %v911
                  %v913 = vld [vmem:[%s863 + $0xc0] sm:$0xff]
                  %914 = vst [vmem:[%s864 + $0x180] sm:$0xff] %v913
                  %v915 = vld [vmem:[%s863 + $0xc8] sm:$0xff]
                  %916 = vst [vmem:[%s864 + $0x190] sm:$0xff] %v915
                  %v917 = vld [vmem:[%s863 + $0xd0] sm:$0xff]
                  %918 = vst [vmem:[%s864 + $0x1a0] sm:$0xff] %v917
                  %v919 = vld [vmem:[%s863 + $0xd8] sm:$0xff]
                  %920 = vst [vmem:[%s864 + $0x1b0] sm:$0xff] %v919
                  %v921 = vld [vmem:[%s863 + $0xe0] sm:$0xff]
                  %922 = vst [vmem:[%s864 + $0x1c0] sm:$0xff] %v921
                  %v923 = vld [vmem:[%s863 + $0xe8] sm:$0xff]
                  %924 = vst [vmem:[%s864 + $0x1d0] sm:$0xff] %v923
                  %v925 = vld [vmem:[%s863 + $0xf0] sm:$0xff]
                  %926 = vst [vmem:[%s864 + $0x1e0] sm:$0xff] %v925
                  %v927 = vld [vmem:[%s863 + $0xf8] sm:$0xff]
                  %928 = vst [vmem:[%s864 + $0x1f0] sm:$0xff] %v927
                $region68: #{_patch_swd_forward.3} parent=62 // loop_footer
                  %s862 = sadd.s32 1, %s858
                $region69: #{_patch_swd_forward.3} parent=62 // loop_footer_branch
                  %857 = sbr.rel target = $region65
                $region70: #{_patch_swd_forward.3} parent=62 // loop_exit
                  _
              $region63: #{_patch_swd_forward.3} parent=47 // pred_fallthru
                _
              // Predicated region
              $region71: #{_patch_swd_forward.3} parent=47 // pred_check
                _
              $region72: #{_patch_swd_forward.3} parent=47 // pred_check_branch
                %930 = sbr.rel target = $region74
              $region73: #{_patch_swd_forward.3} parent=47 // pred_region
                _
              $region74: #{_patch_swd_forward.3} parent=47 // pred_fallthru
                _
            $region48: #{_patch_swd_forward.3} parent=43 // pred_fallthru
              _
            // Predicated region
            $region49: #{_patch_swd_forward.3} parent=43 // pred_check
              _
            $region50: #{_patch_swd_forward.3} parent=43 // pred_check_branch
              %780 = sbr.rel target = $region52
            $region51: #{_patch_swd_forward.3} parent=43 // pred_region
              %s782 = ssub.s32 256, 1
              loop: start=0, step=1, limit=1
              $region53: #{_patch_swd_forward.3} parent=51 // loop_pre_header
                _
              $region54: #{_patch_swd_forward.3} parent=51 // loop_header
                %s784 = sphi 0, %s788
                %p785 = scmp.ge.s32.totalorder %s784, 1
                %s789 = sphi %s768, %s768
                %s790 = sphi %s774, %s774
              $region55: #{_patch_swd_forward.3} parent=51 // loop_header_branch
                %787 = sbr.rel (%p785) target = $region59
              $region56: #{_patch_swd_forward.3} parent=51 // loop_body
                %v791 = vld [vmem:[%s789] sm:%s782]
                %792 = vst [vmem:[%s790] sm:%s782] %v791
                %v793 = vld [vmem:[%s789 + $0x8] sm:%s782]
                %794 = vst [vmem:[%s790 + $0x10] sm:%s782] %v793
                %v795 = vld [vmem:[%s789 + $0x10] sm:%s782]
                %796 = vst [vmem:[%s790 + $0x20] sm:%s782] %v795
                %v797 = vld [vmem:[%s789 + $0x18] sm:%s782]
                %798 = vst [vmem:[%s790 + $0x30] sm:%s782] %v797
                %v799 = vld [vmem:[%s789 + $0x20] sm:%s782]
                %800 = vst [vmem:[%s790 + $0x40] sm:%s782] %v799
                %v801 = vld [vmem:[%s789 + $0x28] sm:%s782]
                %802 = vst [vmem:[%s790 + $0x50] sm:%s782] %v801
                %v803 = vld [vmem:[%s789 + $0x30] sm:%s782]
                %804 = vst [vmem:[%s790 + $0x60] sm:%s782] %v803
                %v805 = vld [vmem:[%s789 + $0x38] sm:%s782]
                %806 = vst [vmem:[%s790 + $0x70] sm:%s782] %v805
                %v807 = vld [vmem:[%s789 + $0x40] sm:%s782]
                %808 = vst [vmem:[%s790 + $0x80] sm:%s782] %v807
                %v809 = vld [vmem:[%s789 + $0x48] sm:%s782]
                %810 = vst [vmem:[%s790 + $0x90] sm:%s782] %v809
                %v811 = vld [vmem:[%s789 + $0x50] sm:%s782]
                %812 = vst [vmem:[%s790 + $0xa0] sm:%s782] %v811
                %v813 = vld [vmem:[%s789 + $0x58] sm:%s782]
                %814 = vst [vmem:[%s790 + $0xb0] sm:%s782] %v813
                %v815 = vld [vmem:[%s789 + $0x60] sm:%s782]
                %816 = vst [vmem:[%s790 + $0xc0] sm:%s782] %v815
                %v817 = vld [vmem:[%s789 + $0x68] sm:%s782]
                %818 = vst [vmem:[%s790 + $0xd0] sm:%s782] %v817
                %v819 = vld [vmem:[%s789 + $0x70] sm:%s782]
                %820 = vst [vmem:[%s790 + $0xe0] sm:%s782] %v819
                %v821 = vld [vmem:[%s789 + $0x78] sm:%s782]
                %822 = vst [vmem:[%s790 + $0xf0] sm:%s782] %v821
                %v823 = vld [vmem:[%s789 + $0x80] sm:%s782]
                %824 = vst [vmem:[%s790 + $0x100] sm:%s782] %v823
                %v825 = vld [vmem:[%s789 + $0x88] sm:%s782]
                %826 = vst [vmem:[%s790 + $0x110] sm:%s782] %v825
                %v827 = vld [vmem:[%s789 + $0x90] sm:%s782]
                %828 = vst [vmem:[%s790 + $0x120] sm:%s782] %v827
                %v829 = vld [vmem:[%s789 + $0x98] sm:%s782]
                %830 = vst [vmem:[%s790 + $0x130] sm:%s782] %v829
                %v831 = vld [vmem:[%s789 + $0xa0] sm:%s782]
                %832 = vst [vmem:[%s790 + $0x140] sm:%s782] %v831
                %v833 = vld [vmem:[%s789 + $0xa8] sm:%s782]
                %834 = vst [vmem:[%s790 + $0x150] sm:%s782] %v833
                %v835 = vld [vmem:[%s789 + $0xb0] sm:%s782]
                %836 = vst [vmem:[%s790 + $0x160] sm:%s782] %v835
                %v837 = vld [vmem:[%s789 + $0xb8] sm:%s782]
                %838 = vst [vmem:[%s790 + $0x170] sm:%s782] %v837
                %v839 = vld [vmem:[%s789 + $0xc0] sm:%s782]
                %840 = vst [vmem:[%s790 + $0x180] sm:%s782] %v839
                %v841 = vld [vmem:[%s789 + $0xc8] sm:%s782]
                %842 = vst [vmem:[%s790 + $0x190] sm:%s782] %v841
                %v843 = vld [vmem:[%s789 + $0xd0] sm:%s782]
                %844 = vst [vmem:[%s790 + $0x1a0] sm:%s782] %v843
                %v845 = vld [vmem:[%s789 + $0xd8] sm:%s782]
                %846 = vst [vmem:[%s790 + $0x1b0] sm:%s782] %v845
                %v847 = vld [vmem:[%s789 + $0xe0] sm:%s782]
                %848 = vst [vmem:[%s790 + $0x1c0] sm:%s782] %v847
                %v849 = vld [vmem:[%s789 + $0xe8] sm:%s782]
                %850 = vst [vmem:[%s790 + $0x1d0] sm:%s782] %v849
                %v851 = vld [vmem:[%s789 + $0xf0] sm:%s782]
                %852 = vst [vmem:[%s790 + $0x1e0] sm:%s782] %v851
                %v853 = vld [vmem:[%s789 + $0xf8] sm:%s782]
                %854 = vst [vmem:[%s790 + $0x1f0] sm:%s782] %v853
              $region57: #{_patch_swd_forward.3} parent=51 // loop_footer
                %s788 = sadd.s32 1, %s784
              $region58: #{_patch_swd_forward.3} parent=51 // loop_footer_branch
                %783 = sbr.rel target = $region54
              $region59: #{_patch_swd_forward.3} parent=51 // loop_exit
                _
            $region52: #{_patch_swd_forward.3} parent=43 // pred_fallthru
              _
          $region44: #{_patch_swd_forward.3} parent=39 // pred_fallthru
            _
          %931 = vnop
        $region40: #{_patch_swd_forward.3} parent=27 // pred_fallthru
          _
      $region28: #{_patch_swd_forward.3} parent=5 // pred_fallthru
        _
      %p932 = scmp.le.s32.totalorder 2, %s8
      // Predicated region
      $region75: #{_patch_swd_forward.3} parent=5 // pred_check
        %p933 = pneg %p932
      $region76: #{_patch_swd_forward.3} parent=5 // pred_check_branch
        %935 = sbr.rel (%p933) target = $region78
      $region77: #{_patch_swd_forward.3} parent=5 // pred_region
        %s936 = ssub.s32 %s8, 2
        // Predicated region
        $region79: #{_patch_swd_forward.3} parent=77 // pred_check
          %p937 = pneg %p100
        $region80: #{_patch_swd_forward.3} parent=77 // pred_check_branch
          %939 = sbr.rel (%p937) target = $region82
        $region81: #{_patch_swd_forward.3} parent=77 // pred_region
          %s940 = sand.u32 %s85, 1
          %s941 = sand.u32 %s85, 1
          %s942 = smul.addr %s941, 256
          %s943 = scalar_lea.vmem [#allocation2], %s942
        $region82: #{_patch_swd_forward.3} parent=77 // pred_fallthru
          _
      $region78: #{_patch_swd_forward.3} parent=5 // pred_fallthru
        _
    $region6: #{_patch_swd_forward.3} parent=1 // loop_footer
      %s12 = sadd.s32 1, %s8
    $region7: #{_patch_swd_forward.3} parent=1 // loop_footer_branch
      %7 = sbr.rel target = $region3
    $region8: #{_patch_swd_forward.3} parent=1 // loop_exit
      _

</llo_original>
